<compile_context>
chip_gen: v6e
topology: v6e:2x2x1
jax: 0.10.0
libtpu: 0.0.40
codegen_flags: <defaults>
</compile_context>

<pallas_src>
import functools

import jax
import jax.numpy as jnp
from jax.experimental import pallas as pl
from jax.experimental.pallas import tpu as pltpu


# ----------------------------- shared helpers --------------------------------
def _edge_masks(height, width):
    """(4, H*W) float32 edge-validity masks for the lane-flattened 3x3 bound.

    Row k masks the k-th neighbour roll (left, right, up, down).  Multiplying
    the rolled array by the 0/1 mask reproduces the zero padding of the 3x3
    window exactly.  pltpu.roll follows jnp.roll semantics (positive shift
    moves data toward higher lane indices).
    """
    lane = jnp.arange(height * width, dtype=jnp.int32)
    col = lane % width
    row = lane // width
    return jnp.stack([
        col != 0,             # roll(+1): lane i receives x[i-1] (left neighbour)
        col != width - 1,     # roll(-1): lane i receives x[i+1] (right neighbour)
        row != 0,             # roll(+W): lane i receives x[i-W] (row above)
        row != height - 1,    # roll(-W): lane i receives x[i+W] (row below)
    ], axis=0).astype(jnp.float32)


def _bound3x3(x, m_ha, m_hb, m_va, m_vb, hw, w):
    """3x3 zero-padded dilation - erosion (tensor_bound(..., 3)), separable."""
    h_a = pltpu.roll(x, 1, axis=1) * m_ha
    h_b = pltpu.roll(x, hw - 1, axis=1) * m_hb
    row_max = jnp.maximum(x, jnp.maximum(h_a, h_b))
    row_min = jnp.minimum(x, jnp.minimum(h_a, h_b))
    dil = jnp.maximum(row_max,
                      jnp.maximum(pltpu.roll(row_max, w, axis=1) * m_va,
                                  pltpu.roll(row_max, hw - w, axis=1) * m_vb))
    ero = jnp.minimum(row_min,
                      jnp.minimum(pltpu.roll(row_min, w, axis=1) * m_va,
                                  pltpu.roll(row_min, hw - w, axis=1) * m_vb))
    return dil - ero


# ------------------------------- main kernel ----------------------------------
def _msbl_kernel(mask_ref, gt_ref, logit_ref,          # inputs
                 iou_ref, bce_ref,                      # outputs (per-row partials)
                 gtb_ref, sgt_ref, sgtb_ref,            # scratch
                 *, height, width, binary_gt):
    s = pl.program_id(1)                                # scale index 0..2
    hw = height * width

    m_ha = mask_ref[0:1, :]
    m_hb = mask_ref[1:2, :]
    m_va = mask_ref[2:3, :]
    m_vb = mask_ref[3:4, :]

    gt = gt_ref[...].astype(jnp.float32)                # (TR, HW), resident per tile
    x = logit_ref[...].astype(jnp.float32)              # (TR, HW), scale-s logits

    # Sigmoid once; reused by BCE-with-logits, IoU and the predicted bound.
    p = 1.0 / (1.0 + jnp.exp(-x))
    pb = _bound3x3(p, m_ha, m_hb, m_va, m_vb, hw, width)

    @pl.when(s == 0)
    def _init():
        gtb0 = _bound3x3(gt, m_ha, m_hb, m_va, m_vb, hw, width)
        gtb_ref[...] = gtb0                              # reused for scales 1, 2
        sgt_ref[...] = jnp.sum(gt, axis=1, keepdims=True)
        sgtb_ref[...] = jnp.sum(gtb0, axis=1, keepdims=True)
        iou_ref[...] = jnp.zeros_like(iou_ref)
        bce_ref[...] = jnp.zeros_like(bce_ref)

    gtb = gtb_ref[...]

    # ---- IOUBCELoss(out_s, gt): BCEWithLogits + (1 - IoU) per row ------------
    #   softplus(-|x|) == -log(max(p, 1 - p))  (reuses the sigmoid, saves an exp)
    bce1 = jnp.maximum(x, 0.0) - x * gt - jnp.log(jnp.maximum(p, 1.0 - p))
    inter1 = jnp.sum(p * gt, axis=1, keepdims=True)
    union1 = jnp.sum(p, axis=1, keepdims=True) + sgt_ref[...]    # cached sum(gt)
    iou1 = (inter1 + 1.0) / (union1 - inter1 + 1.0)

    # ---- IOUBCEWithoutLogitLoss(bound(sigmoid(out_s)), bound(gt)) ------------
    if binary_gt:
        # gt (and hence its bound) is {0, 1}: one clamped log per element.
        bce2 = -jnp.maximum(jnp.log(jnp.where(gtb > 0.5, pb, 1.0 - pb)), -100.0)
    else:
        bce2 = -(gtb * jnp.maximum(jnp.log(pb), -100.0)
                 + (1.0 - gtb) * jnp.maximum(jnp.log(1.0 - pb), -100.0))
    inter2 = jnp.sum(pb * gtb, axis=1, keepdims=True)
    union2 = jnp.sum(pb, axis=1, keepdims=True) + sgtb_ref[...]  # cached sum(gtb)
    iou2 = (inter2 + 1.0) / (union2 - inter2 + 1.0)

    # Per-row partials accumulated over the 3 scales; the per-channel /
    # per-batch combine is a tiny epilogue in the wrapper.
    iou_ref[...] += 2.0 - iou1 - iou2
    bce_ref[...] += jnp.sum(bce1 + bce2, axis=1, keepdims=True)


# -------------------- bound0[0] / predict_bound0[0] side kernel ---------------
def _bound0_kernel(mask_ref, gt_ref, x_ref, b0_ref, pb0_ref, *, height, width):
    hw = height * width
    m_ha = mask_ref[0:1, :]
    m_hb = mask_ref[1:2, :]
    m_va = mask_ref[2:3, :]
    m_vb = mask_ref[3:4, :]
    gt = gt_ref[...].astype(jnp.float32)
    p = 1.0 / (1.0 + jnp.exp(-x_ref[...].astype(jnp.float32)))
    b0_ref[...] = _bound3x3(gt, m_ha, m_hb, m_va, m_vb, hw, width)
    pb0_ref[...] = _bound3x3(p, m_ha, m_hb, m_va, m_vb, hw, width)


# --------------------------------- wrapper ------------------------------------
@functools.partial(jax.jit, static_argnames=("row_tile", "assume_binary_gt"))
def mul_scale_bound_loss(gt, out0, out1, out2, *, row_tile=None,
                         assume_binary_gt=True):
    """Returns (loss (C,), bound0[0] (C,H,W), predict_bound0[0] (C,H,W))."""
    B, C, H, W = gt.shape
    HW = H * W
    rows = B * C

    if row_tile is None:
        if rows % 8:
            row_tile = rows                          # unaligned: single tile
        else:
            # Largest multiple-of-8 divisor of rows whose f32 (tile, HW) slab
            # stays around <=8 MiB: keeps gt + gtb-cache + temps comfortable
            # even within v7x's 64 MiB VMEM at production resolutions.
            best = 8
            for cand in range(8, rows + 1, 8):
                if rows % cand == 0 and cand * HW * 4 <= (8 << 20):
                    best = cand
            row_tile = best
    assert rows % row_tile == 0, "row_tile must divide B*C"

    masks = _edge_masks(H, W)                                    # (4, HW) f32
    gt2 = gt.reshape(rows, HW)                                   # native dtype
    # Logits kept in their native dtype (bf16 halves the streamed DMA);
    # cast to f32 inside the kernel.
    logits = jnp.stack([out0, out1, out2], axis=0).reshape(3, rows, HW)

    kernel = functools.partial(_msbl_kernel, height=H, width=W,
                               binary_gt=assume_binary_gt)
    iou_part, bce_part = pl.pallas_call(
        kernel,
        grid=(rows // row_tile, 3),
        in_specs=[
            pl.BlockSpec((4, HW), lambda r, s: (0, 0)),                  # edge masks (resident)
            pl.BlockSpec((row_tile, HW), lambda r, s: (r, 0)),           # gt (resident per tile)
            pl.BlockSpec((None, row_tile, HW), lambda r, s: (s, r, 0)),  # logits (streamed)
        ],
        out_specs=(
            pl.BlockSpec((row_tile, 1), lambda r, s: (r, 0)),            # per-row IoU partial
            pl.BlockSpec((row_tile, 1), lambda r, s: (r, 0)),            # per-row BCE sum
        ),
        out_shape=(
            jax.ShapeDtypeStruct((rows, 1), jnp.float32),
            jax.ShapeDtypeStruct((rows, 1), jnp.float32),
        ),
        scratch_shapes=[
            pltpu.VMEM((row_tile, HW), jnp.float32),                     # gt bound cache
            pltpu.VMEM((row_tile, 1), jnp.float32),                      # cached sum(gt)
            pltpu.VMEM((row_tile, 1), jnp.float32),                      # cached sum(gt bound)
        ],
        compiler_params=pltpu.CompilerParams(
            dimension_semantics=("parallel", "arbitrary")),
    )(masks, gt2, logits)

    # bound0[0] / predict_bound0[0] only need (batch 0, scale 0): a separate
    # tiny call keeps two resident (C, HW) outputs out of the main loop.
    b0, pb0 = pl.pallas_call(
        functools.partial(_bound0_kernel, height=H, width=W),
        grid=(1,),
        in_specs=[
            pl.BlockSpec((4, HW), lambda i: (0, 0)),
            pl.BlockSpec((C, HW), lambda i: (0, 0)),
            pl.BlockSpec((C, HW), lambda i: (0, 0)),
        ],
        out_specs=(
            pl.BlockSpec((C, HW), lambda i: (0, 0)),
            pl.BlockSpec((C, HW), lambda i: (0, 0)),
        ),
        out_shape=(
            jax.ShapeDtypeStruct((C, HW), jnp.float32),
            jax.ShapeDtypeStruct((C, HW), jnp.float32),
        ),
    )(masks, gt[0].reshape(C, HW), out0[0].reshape(C, HW))

    # Epilogue (O(B*C) work): per-channel batch mean of the IoU terms plus the
    # channel-shared BCE mean.
    loss = (iou_part.reshape(B, C).sum(axis=0)
            + bce_part.sum() * (1.0 / (C * HW))) / B
    return loss, b0.reshape(C, H, W), pb0.reshape(C, H, W)


# ------------------------- pure-JAX reference ---------------------------------
def _ref_forward(gt, outs):
    def tensor_bound(img):
        H, W = img.shape[2], img.shape[3]
        pad = jnp.pad(img, ((0, 0), (0, 0), (1, 1), (1, 1)))
        wins = jnp.stack([pad[:, :, dy:dy + H, dx:dx + W]
                          for dy in range(3) for dx in range(3)], axis=-1)
        return wins.max(-1) - wins.min(-1)

    def sig(x):
        return 1.0 / (1.0 + jnp.exp(-x))

    def ioubce_logits(x, t):
        b = x.shape[0]
        bce_el = jnp.maximum(x, 0.0) - x * t + jnp.log(1.0 + jnp.exp(-jnp.abs(x)))
        bce = bce_el.mean(axis=(1, 2, 3))
        p = sig(x)
        inter = (p * t).sum(axis=(2, 3))
        union = (p + t).sum(axis=(2, 3))
        iou = (inter + 1.0) / (union - inter + 1.0)
        return (1.0 - iou + bce[:, None]).sum(0) / b

    def ioubce_plain(p, t):
        b = p.shape[0]
        bce_el = -(t * jnp.maximum(jnp.log(p), -100.0)
                   + (1.0 - t) * jnp.maximum(jnp.log(1.0 - p), -100.0))
        bce = bce_el.mean(axis=(1, 2, 3))
        inter = (p * t).sum(axis=(2, 3))
        union = (p + t).sum(axis=(2, 3))
        iou = (inter + 1.0) / (union - inter + 1.0)
        return (1.0 - iou + bce[:, None]).sum(0) / b

    b0 = tensor_bound(gt)
    pbs = [tensor_bound(sig(o)) for o in outs]
    loss = (sum(ioubce_logits(o, gt) for o in outs)
            + sum(ioubce_plain(pb, b0) for pb in pbs))
    return loss, b0[0], pbs[0][0]


if __name__ == "__main__":
    key = jax.random.PRNGKey(0)
    k_gt, k0, k1, k2 = jax.random.split(key, 4)

    B, C, H, W = 2, 4, 16, 16
    gt = (jax.random.uniform(k_gt, (B, C, H, W)) > 0.5).astype(jnp.float32)
    out0 = jax.random.normal(k0, (B, C, H, W), dtype=jnp.float32)
    out1 = jax.random.normal(k1, (B, C, H, W), dtype=jnp.float32)
    out2 = jax.random.normal(k2, (B, C, H, W), dtype=jnp.float32)

    loss, bound0_first, pbound0_first = mul_scale_bound_loss(gt, out0, out1, out2)
    jax.block_until_ready((loss, bound0_first, pbound0_first))

    ref_loss, ref_b0, ref_pb0 = _ref_forward(gt, [out0, out1, out2])
    assert jnp.allclose(loss, ref_loss, atol=1e-4, rtol=1e-4)
    assert jnp.allclose(bound0_first, ref_b0, atol=1e-5)
    assert jnp.allclose(pbound0_first, ref_pb0, atol=1e-5)

    print("KERNEL_OK")
</pallas_src>

<mosaic_0001>
module attributes {stable_mosaic.version = 11 : i64} {
  func.func @_msbl_kernel(%arg0: i32, %arg1: i32, %arg2: memref<4x256xf32, #tpu.memory_space<vmem>>, %arg3: memref<8x256xf32, #tpu.memory_space<vmem>>, %arg4: memref<1x8x256xf32, #tpu.memory_space<vmem>>, %arg5: memref<8x1xf32, #tpu.memory_space<vmem>>, %arg6: memref<8x1xf32, #tpu.memory_space<vmem>>, %arg7: memref<8x256xf32, #tpu.memory_space<vmem>>, %arg8: memref<8x1xf32, #tpu.memory_space<vmem>>, %arg9: memref<8x1xf32, #tpu.memory_space<vmem>>) attributes {dimension_semantics = [#tpu.dimension_semantics<parallel>, #tpu.dimension_semantics<arbitrary>], iteration_bounds = array<i64: 1, 3>, scalar_prefetch = 0 : i64, scratch_operands = 3 : i64, tpu.core_type = #tpu.core_type<tc>, window_params = [{pipeline_mode = #tpu.pipeline_mode<synchronous>, transform_indices = @transform_0, window_bounds = array<i64: 4, 256>}, {transform_indices = @transform_1, window_bounds = array<i64: 8, 256>}, {transform_indices = @transform_2, window_bounds = array<i64: 1, 8, 256>}, {transform_indices = @transform_3, window_bounds = array<i64: 8, 1>}, {transform_indices = @transform_4, window_bounds = array<i64: 8, 1>}]} {
    %c0 = arith.constant 0 : index
    %c0_0 = arith.constant 0 : index
    %0 = vector.load %arg2[%c0, %c0_0] : memref<4x256xf32, #tpu.memory_space<vmem>>, vector<1x256xf32>
    %c1 = arith.constant 1 : index
    %c0_1 = arith.constant 0 : index
    %1 = vector.load %arg2[%c1, %c0_1] : memref<4x256xf32, #tpu.memory_space<vmem>>, vector<1x256xf32>
    %c2 = arith.constant 2 : index
    %c0_2 = arith.constant 0 : index
    %2 = vector.load %arg2[%c2, %c0_2] : memref<4x256xf32, #tpu.memory_space<vmem>>, vector<1x256xf32>
    %c3 = arith.constant 3 : index
    %c0_3 = arith.constant 0 : index
    %3 = vector.load %arg2[%c3, %c0_3] : memref<4x256xf32, #tpu.memory_space<vmem>>, vector<1x256xf32>
    %c0_4 = arith.constant 0 : index
    %c0_5 = arith.constant 0 : index
    %4 = vector.load %arg3[%c0_4, %c0_5] : memref<8x256xf32, #tpu.memory_space<vmem>>, vector<8x256xf32>
    %c0_6 = arith.constant 0 : index
    %c0_7 = arith.constant 0 : index
    %c0_8 = arith.constant 0 : index
    %5 = vector.load %arg4[%c0_6, %c0_7, %c0_8] : memref<1x8x256xf32, #tpu.memory_space<vmem>>, vector<1x8x256xf32>
    %6 = vector.shape_cast %5 : vector<1x8x256xf32> to vector<8x256xf32>
    %cst = arith.constant 0.000000e+00 : f32
    %7 = vector.broadcast %cst : f32 to vector<8x256xf32>
    %8 = arith.subf %7, %6 : vector<8x256xf32>
    %9 = math.exp %8 : vector<8x256xf32>
    %cst_9 = arith.constant 1.000000e+00 : f32
    %10 = vector.broadcast %cst_9 : f32 to vector<8x256xf32>
    %11 = arith.addf %10, %9 : vector<8x256xf32>
    %cst_10 = arith.constant 1.000000e+00 : f32
    %12 = vector.broadcast %cst_10 : f32 to vector<8x256xf32>
    %13 = arith.divf %12, %11 : vector<8x256xf32>
    %c1_i32 = arith.constant 1 : i32
    %14 = tpu.dynamic_rotate %13 by %c1_i32 dim 1 : vector<8x256xf32>, i32 -> vector<8x256xf32>
    %15 = vector.broadcast %0 : vector<1x256xf32> to vector<8x256xf32>
    %16 = arith.mulf %14, %15 : vector<8x256xf32>
    %c255_i32 = arith.constant 255 : i32
    %17 = tpu.dynamic_rotate %13 by %c255_i32 dim 1 : vector<8x256xf32>, i32 -> vector<8x256xf32>
    %18 = vector.broadcast %1 : vector<1x256xf32> to vector<8x256xf32>
    %19 = arith.mulf %17, %18 : vector<8x256xf32>
    %20 = arith.maximumf %16, %19 : vector<8x256xf32>
    %21 = arith.maximumf %13, %20 : vector<8x256xf32>
    %22 = arith.minimumf %16, %19 : vector<8x256xf32>
    %23 = arith.minimumf %13, %22 : vector<8x256xf32>
    %c16_i32 = arith.constant 16 : i32
    %24 = tpu.dynamic_rotate %21 by %c16_i32 dim 1 : vector<8x256xf32>, i32 -> vector<8x256xf32>
    %25 = vector.broadcast %2 : vector<1x256xf32> to vector<8x256xf32>
    %26 = arith.mulf %24, %25 : vector<8x256xf32>
    %c240_i32 = arith.constant 240 : i32
    %27 = tpu.dynamic_rotate %21 by %c240_i32 dim 1 : vector<8x256xf32>, i32 -> vector<8x256xf32>
    %28 = vector.broadcast %3 : vector<1x256xf32> to vector<8x256xf32>
    %29 = arith.mulf %27, %28 : vector<8x256xf32>
    %30 = arith.maximumf %26, %29 : vector<8x256xf32>
    %31 = arith.maximumf %21, %30 : vector<8x256xf32>
    %c16_i32_11 = arith.constant 16 : i32
    %32 = tpu.dynamic_rotate %23 by %c16_i32_11 dim 1 : vector<8x256xf32>, i32 -> vector<8x256xf32>
    %33 = vector.broadcast %2 : vector<1x256xf32> to vector<8x256xf32>
    %34 = arith.mulf %32, %33 : vector<8x256xf32>
    %c240_i32_12 = arith.constant 240 : i32
    %35 = tpu.dynamic_rotate %23 by %c240_i32_12 dim 1 : vector<8x256xf32>, i32 -> vector<8x256xf32>
    %36 = vector.broadcast %3 : vector<1x256xf32> to vector<8x256xf32>
    %37 = arith.mulf %35, %36 : vector<8x256xf32>
    %38 = arith.minimumf %34, %37 : vector<8x256xf32>
    %39 = arith.minimumf %23, %38 : vector<8x256xf32>
    %40 = arith.subf %31, %39 : vector<8x256xf32>
    %c0_i32 = arith.constant 0 : i32
    %41 = arith.cmpi eq, %arg1, %c0_i32 : i32
    %42 = arith.extui %41 : i1 to i32
    %c0_i32_13 = arith.constant 0 : i32
    %43 = arith.cmpi ne, %42, %c0_i32_13 : i32
    scf.if %43 {
      %c1_i32_44 = arith.constant 1 : i32
      %102 = tpu.dynamic_rotate %4 by %c1_i32_44 dim 1 : vector<8x256xf32>, i32 -> vector<8x256xf32>
      %103 = vector.broadcast %0 : vector<1x256xf32> to vector<8x256xf32>
      %104 = arith.mulf %102, %103 : vector<8x256xf32>
      %c255_i32_45 = arith.constant 255 : i32
      %105 = tpu.dynamic_rotate %4 by %c255_i32_45 dim 1 : vector<8x256xf32>, i32 -> vector<8x256xf32>
      %106 = vector.broadcast %1 : vector<1x256xf32> to vector<8x256xf32>
      %107 = arith.mulf %105, %106 : vector<8x256xf32>
      %108 = arith.maximumf %104, %107 : vector<8x256xf32>
      %109 = arith.maximumf %4, %108 : vector<8x256xf32>
      %110 = arith.minimumf %104, %107 : vector<8x256xf32>
      %111 = arith.minimumf %4, %110 : vector<8x256xf32>
      %c16_i32_46 = arith.constant 16 : i32
      %112 = tpu.dynamic_rotate %109 by %c16_i32_46 dim 1 : vector<8x256xf32>, i32 -> vector<8x256xf32>
      %113 = vector.broadcast %2 : vector<1x256xf32> to vector<8x256xf32>
      %114 = arith.mulf %112, %113 : vector<8x256xf32>
      %c240_i32_47 = arith.constant 240 : i32
      %115 = tpu.dynamic_rotate %109 by %c240_i32_47 dim 1 : vector<8x256xf32>, i32 -> vector<8x256xf32>
      %116 = vector.broadcast %3 : vector<1x256xf32> to vector<8x256xf32>
      %117 = arith.mulf %115, %116 : vector<8x256xf32>
      %118 = arith.maximumf %114, %117 : vector<8x256xf32>
      %119 = arith.maximumf %109, %118 : vector<8x256xf32>
      %c16_i32_48 = arith.constant 16 : i32
      %120 = tpu.dynamic_rotate %111 by %c16_i32_48 dim 1 : vector<8x256xf32>, i32 -> vector<8x256xf32>
      %121 = vector.broadcast %2 : vector<1x256xf32> to vector<8x256xf32>
      %122 = arith.mulf %120, %121 : vector<8x256xf32>
      %c240_i32_49 = arith.constant 240 : i32
      %123 = tpu.dynamic_rotate %111 by %c240_i32_49 dim 1 : vector<8x256xf32>, i32 -> vector<8x256xf32>
      %124 = vector.broadcast %3 : vector<1x256xf32> to vector<8x256xf32>
      %125 = arith.mulf %123, %124 : vector<8x256xf32>
      %126 = arith.minimumf %122, %125 : vector<8x256xf32>
      %127 = arith.minimumf %111, %126 : vector<8x256xf32>
      %128 = arith.subf %119, %127 : vector<8x256xf32>
      %c0_50 = arith.constant 0 : index
      %c0_51 = arith.constant 0 : index
      %129 = vector.load %arg7[%c0_50, %c0_51] : memref<8x256xf32, #tpu.memory_space<vmem>>, vector<8x256xf32>
      tpu.vector_store %arg7[%c0_50, %c0_51], %128 {strides = array<i32>} : memref<8x256xf32, #tpu.memory_space<vmem>>, vector<8x256xf32>,
      %cst_52 = arith.constant dense<0.000000e+00> : vector<8xf32>
      %130 = vector.multi_reduction <add>, %4, %cst_52 [1] : vector<8x256xf32> to vector<8xf32>
      %131 = vector.shape_cast %130 : vector<8xf32> to vector<8x1xf32>
      %c0_53 = arith.constant 0 : index
      %c0_54 = arith.constant 0 : index
      %132 = vector.load %arg8[%c0_53, %c0_54] : memref<8x1xf32, #tpu.memory_space<vmem>>, vector<8x1xf32>
      tpu.vector_store %arg8[%c0_53, %c0_54], %131 {strides = array<i32>} : memref<8x1xf32, #tpu.memory_space<vmem>>, vector<8x1xf32>,
      %cst_55 = arith.constant dense<0.000000e+00> : vector<8xf32>
      %133 = vector.multi_reduction <add>, %128, %cst_55 [1] : vector<8x256xf32> to vector<8xf32>
      %134 = vector.shape_cast %133 : vector<8xf32> to vector<8x1xf32>
      %c0_56 = arith.constant 0 : index
      %c0_57 = arith.constant 0 : index
      %135 = vector.load %arg9[%c0_56, %c0_57] : memref<8x1xf32, #tpu.memory_space<vmem>>, vector<8x1xf32>
      tpu.vector_store %arg9[%c0_56, %c0_57], %134 {strides = array<i32>} : memref<8x1xf32, #tpu.memory_space<vmem>>, vector<8x1xf32>,
      %cst_58 = arith.constant 0.000000e+00 : f32
      %136 = vector.broadcast %cst_58 : f32 to vector<8x1xf32>
      %c0_59 = arith.constant 0 : index
      %c0_60 = arith.constant 0 : index
      %137 = vector.load %arg5[%c0_59, %c0_60] : memref<8x1xf32, #tpu.memory_space<vmem>>, vector<8x1xf32>
      tpu.vector_store %arg5[%c0_59, %c0_60], %136 {strides = array<i32>} : memref<8x1xf32, #tpu.memory_space<vmem>>, vector<8x1xf32>,
      %cst_61 = arith.constant 0.000000e+00 : f32
      %138 = vector.broadcast %cst_61 : f32 to vector<8x1xf32>
      %c0_62 = arith.constant 0 : index
      %c0_63 = arith.constant 0 : index
      %139 = vector.load %arg6[%c0_62, %c0_63] : memref<8x1xf32, #tpu.memory_space<vmem>>, vector<8x1xf32>
      tpu.vector_store %arg6[%c0_62, %c0_63], %138 {strides = array<i32>} : memref<8x1xf32, #tpu.memory_space<vmem>>, vector<8x1xf32>,
    } else {
    }
    %c0_14 = arith.constant 0 : index
    %c0_15 = arith.constant 0 : index
    %44 = vector.load %arg7[%c0_14, %c0_15] : memref<8x256xf32, #tpu.memory_space<vmem>>, vector<8x256xf32>
    %cst_16 = arith.constant 0.000000e+00 : f32
    %45 = vector.broadcast %cst_16 : f32 to vector<8x256xf32>
    %46 = arith.maximumf %6, %45 : vector<8x256xf32>
    %47 = arith.mulf %6, %4 : vector<8x256xf32>
    %48 = arith.subf %46, %47 : vector<8x256xf32>
    %cst_17 = arith.constant 1.000000e+00 : f32
    %49 = vector.broadcast %cst_17 : f32 to vector<8x256xf32>
    %50 = arith.subf %49, %13 : vector<8x256xf32>
    %51 = arith.maximumf %13, %50 : vector<8x256xf32>
    %52 = math.log %51 : vector<8x256xf32>
    %53 = arith.subf %48, %52 : vector<8x256xf32>
    %54 = arith.mulf %13, %4 : vector<8x256xf32>
    %cst_18 = arith.constant dense<0.000000e+00> : vector<8xf32>
    %55 = vector.multi_reduction <add>, %54, %cst_18 [1] : vector<8x256xf32> to vector<8xf32>
    %56 = vector.shape_cast %55 : vector<8xf32> to vector<8x1xf32>
    %cst_19 = arith.constant dense<0.000000e+00> : vector<8xf32>
    %57 = vector.multi_reduction <add>, %13, %cst_19 [1] : vector<8x256xf32> to vector<8xf32>
    %58 = vector.shape_cast %57 : vector<8xf32> to vector<8x1xf32>
    %c0_20 = arith.constant 0 : index
    %c0_21 = arith.constant 0 : index
    %59 = vector.load %arg8[%c0_20, %c0_21] : memref<8x1xf32, #tpu.memory_space<vmem>>, vector<8x1xf32>
    %60 = arith.addf %58, %59 : vector<8x1xf32>
    %cst_22 = arith.constant 1.000000e+00 : f32
    %61 = vector.broadcast %cst_22 : f32 to vector<8x1xf32>
    %62 = arith.addf %56, %61 : vector<8x1xf32>
    %63 = arith.subf %60, %56 : vector<8x1xf32>
    %cst_23 = arith.constant 1.000000e+00 : f32
    %64 = vector.broadcast %cst_23 : f32 to vector<8x1xf32>
    %65 = arith.addf %63, %64 : vector<8x1xf32>
    %66 = arith.divf %62, %65 : vector<8x1xf32>
    %cst_24 = arith.constant 5.000000e-01 : f32
    %67 = vector.broadcast %cst_24 : f32 to vector<8x256xf32>
    %68 = arith.cmpf ogt, %44, %67 : vector<8x256xf32>
    %cst_25 = arith.constant 1.000000e+00 : f32
    %69 = vector.broadcast %cst_25 : f32 to vector<8x256xf32>
    %70 = arith.subf %69, %40 : vector<8x256xf32>
    %71 = arith.select %68, %40, %70 : vector<8x256xi1>, vector<8x256xf32>
    %72 = math.log %71 : vector<8x256xf32>
    %cst_26 = arith.constant -1.000000e+02 : f32
    %73 = vector.broadcast %cst_26 : f32 to vector<8x256xf32>
    %74 = arith.maximumf %72, %73 : vector<8x256xf32>
    %cst_27 = arith.constant 0.000000e+00 : f32
    %75 = vector.broadcast %cst_27 : f32 to vector<8x256xf32>
    %76 = arith.subf %75, %74 : vector<8x256xf32>
    %77 = arith.mulf %40, %44 : vector<8x256xf32>
    %cst_28 = arith.constant dense<0.000000e+00> : vector<8xf32>
    %78 = vector.multi_reduction <add>, %77, %cst_28 [1] : vector<8x256xf32> to vector<8xf32>
    %79 = vector.shape_cast %78 : vector<8xf32> to vector<8x1xf32>
    %cst_29 = arith.constant dense<0.000000e+00> : vector<8xf32>
    %80 = vector.multi_reduction <add>, %40, %cst_29 [1] : vector<8x256xf32> to vector<8xf32>
    %81 = vector.shape_cast %80 : vector<8xf32> to vector<8x1xf32>
    %c0_30 = arith.constant 0 : index
    %c0_31 = arith.constant 0 : index
    %82 = vector.load %arg9[%c0_30, %c0_31] : memref<8x1xf32, #tpu.memory_space<vmem>>, vector<8x1xf32>
    %83 = arith.addf %81, %82 : vector<8x1xf32>
    %cst_32 = arith.constant 1.000000e+00 : f32
    %84 = vector.broadcast %cst_32 : f32 to vector<8x1xf32>
    %85 = arith.addf %79, %84 : vector<8x1xf32>
    %86 = arith.subf %83, %79 : vector<8x1xf32>
    %cst_33 = arith.constant 1.000000e+00 : f32
    %87 = vector.broadcast %cst_33 : f32 to vector<8x1xf32>
    %88 = arith.addf %86, %87 : vector<8x1xf32>
    %89 = arith.divf %85, %88 : vector<8x1xf32>
    %c0_34 = arith.constant 0 : index
    %c0_35 = arith.constant 0 : index
    %90 = vector.load %arg5[%c0_34, %c0_35] : memref<8x1xf32, #tpu.memory_space<vmem>>, vector<8x1xf32>
    %cst_36 = arith.constant 2.000000e+00 : f32
    %91 = vector.broadcast %cst_36 : f32 to vector<8x1xf32>
    %92 = arith.subf %91, %66 : vector<8x1xf32>
    %93 = arith.subf %92, %89 : vector<8x1xf32>
    %94 = arith.addf %90, %93 : vector<8x1xf32>
    %c0_37 = arith.constant 0 : index
    %c0_38 = arith.constant 0 : index
    %95 = vector.load %arg5[%c0_37, %c0_38] : memref<8x1xf32, #tpu.memory_space<vmem>>, vector<8x1xf32>
    tpu.vector_store %arg5[%c0_37, %c0_38], %94 {strides = array<i32>} : memref<8x1xf32, #tpu.memory_space<vmem>>, vector<8x1xf32>,
    %c0_39 = arith.constant 0 : index
    %c0_40 = arith.constant 0 : index
    %96 = vector.load %arg6[%c0_39, %c0_40] : memref<8x1xf32, #tpu.memory_space<vmem>>, vector<8x1xf32>
    %97 = arith.addf %53, %76 : vector<8x256xf32>
    %cst_41 = arith.constant dense<0.000000e+00> : vector<8xf32>
    %98 = vector.multi_reduction <add>, %97, %cst_41 [1] : vector<8x256xf32> to vector<8xf32>
    %99 = vector.shape_cast %98 : vector<8xf32> to vector<8x1xf32>
    %100 = arith.addf %96, %99 : vector<8x1xf32>
    %c0_42 = arith.constant 0 : index
    %c0_43 = arith.constant 0 : index
    %101 = vector.load %arg6[%c0_42, %c0_43] : memref<8x1xf32, #tpu.memory_space<vmem>>, vector<8x1xf32>
    tpu.vector_store %arg6[%c0_42, %c0_43], %100 {strides = array<i32>} : memref<8x1xf32, #tpu.memory_space<vmem>>, vector<8x1xf32>,
    return
  }
  func.func @transform_0(%arg0: i32, %arg1: i32) -> (i32, i32) {
    %c0_i32 = arith.constant 0 : i32
    %c0_i32_0 = arith.constant 0 : i32
    %c0_i32_1 = arith.constant 0 : i32
    return %c0_i32, %c0_i32_0 : i32, i32
  }
  func.func @transform_1(%arg0: i32, %arg1: i32) -> (i32, i32) {
    %c0_i32 = arith.constant 0 : i32
    %c0_i32_0 = arith.constant 0 : i32
    return %arg0, %c0_i32 : i32, i32
  }
  func.func @transform_2(%arg0: i32, %arg1: i32) -> (i32, i32, i32) {
    %c0_i32 = arith.constant 0 : i32
    %c0_i32_0 = arith.constant 0 : i32
    return %arg1, %arg0, %c0_i32 : i32, i32, i32
  }
  func.func @transform_3(%arg0: i32, %arg1: i32) -> (i32, i32) {
    %c0_i32 = arith.constant 0 : i32
    %c0_i32_0 = arith.constant 0 : i32
    return %arg0, %c0_i32 : i32, i32
  }
  func.func @transform_4(%arg0: i32, %arg1: i32) -> (i32, i32) {
    %c0_i32 = arith.constant 0 : i32
    %c0_i32_0 = arith.constant 0 : i32
    return %arg0, %c0_i32 : i32, i32
  }
}

module attributes {stable_mosaic.version = 11 : i64} {
  func.func @_bound0_kernel(%arg0: i32, %arg1: memref<4x256xf32, #tpu.memory_space<vmem>>, %arg2: memref<4x256xf32, #tpu.memory_space<vmem>>, %arg3: memref<4x256xf32, #tpu.memory_space<vmem>>, %arg4: memref<4x256xf32, #tpu.memory_space<vmem>>, %arg5: memref<4x256xf32, #tpu.memory_space<vmem>>) attributes {dimension_semantics = [#tpu.dimension_semantics<arbitrary>], iteration_bounds = array<i64: 1>, scalar_prefetch = 0 : i64, scratch_operands = 0 : i64, tpu.core_type = #tpu.core_type<tc>, window_params = [{pipeline_mode = #tpu.pipeline_mode<synchronous>, transform_indices = @transform_0, window_bounds = array<i64: 4, 256>}, {pipeline_mode = #tpu.pipeline_mode<synchronous>, transform_indices = @transform_1, window_bounds = array<i64: 4, 256>}, {pipeline_mode = #tpu.pipeline_mode<synchronous>, transform_indices = @transform_2, window_bounds = array<i64: 4, 256>}, {pipeline_mode = #tpu.pipeline_mode<synchronous>, transform_indices = @transform_3, window_bounds = array<i64: 4, 256>}, {pipeline_mode = #tpu.pipeline_mode<synchronous>, transform_indices = @transform_4, window_bounds = array<i64: 4, 256>}]} {
    %c0 = arith.constant 0 : index
    %c0_0 = arith.constant 0 : index
    %0 = vector.load %arg1[%c0, %c0_0] : memref<4x256xf32, #tpu.memory_space<vmem>>, vector<1x256xf32>
    %c1 = arith.constant 1 : index
    %c0_1 = arith.constant 0 : index
    %1 = vector.load %arg1[%c1, %c0_1] : memref<4x256xf32, #tpu.memory_space<vmem>>, vector<1x256xf32>
    %c2 = arith.constant 2 : index
    %c0_2 = arith.constant 0 : index
    %2 = vector.load %arg1[%c2, %c0_2] : memref<4x256xf32, #tpu.memory_space<vmem>>, vector<1x256xf32>
    %c3 = arith.constant 3 : index
    %c0_3 = arith.constant 0 : index
    %3 = vector.load %arg1[%c3, %c0_3] : memref<4x256xf32, #tpu.memory_space<vmem>>, vector<1x256xf32>
    %c0_4 = arith.constant 0 : index
    %c0_5 = arith.constant 0 : index
    %4 = vector.load %arg2[%c0_4, %c0_5] : memref<4x256xf32, #tpu.memory_space<vmem>>, vector<4x256xf32>
    %c0_6 = arith.constant 0 : index
    %c0_7 = arith.constant 0 : index
    %5 = vector.load %arg3[%c0_6, %c0_7] : memref<4x256xf32, #tpu.memory_space<vmem>>, vector<4x256xf32>
    %cst = arith.constant 0.000000e+00 : f32
    %6 = vector.broadcast %cst : f32 to vector<4x256xf32>
    %7 = arith.subf %6, %5 : vector<4x256xf32>
    %8 = math.exp %7 : vector<4x256xf32>
    %cst_8 = arith.constant 1.000000e+00 : f32
    %9 = vector.broadcast %cst_8 : f32 to vector<4x256xf32>
    %10 = arith.addf %9, %8 : vector<4x256xf32>
    %cst_9 = arith.constant 1.000000e+00 : f32
    %11 = vector.broadcast %cst_9 : f32 to vector<4x256xf32>
    %12 = arith.divf %11, %10 : vector<4x256xf32>
    %c1_i32 = arith.constant 1 : i32
    %13 = tpu.dynamic_rotate %4 by %c1_i32 dim 1 : vector<4x256xf32>, i32 -> vector<4x256xf32>
    %14 = vector.broadcast %0 : vector<1x256xf32> to vector<4x256xf32>
    %15 = arith.mulf %13, %14 : vector<4x256xf32>
    %c255_i32 = arith.constant 255 : i32
    %16 = tpu.dynamic_rotate %4 by %c255_i32 dim 1 : vector<4x256xf32>, i32 -> vector<4x256xf32>
    %17 = vector.broadcast %1 : vector<1x256xf32> to vector<4x256xf32>
    %18 = arith.mulf %16, %17 : vector<4x256xf32>
    %19 = arith.maximumf %15, %18 : vector<4x256xf32>
    %20 = arith.maximumf %4, %19 : vector<4x256xf32>
    %21 = arith.minimumf %15, %18 : vector<4x256xf32>
    %22 = arith.minimumf %4, %21 : vector<4x256xf32>
    %c16_i32 = arith.constant 16 : i32
    %23 = tpu.dynamic_rotate %20 by %c16_i32 dim 1 : vector<4x256xf32>, i32 -> vector<4x256xf32>
    %24 = vector.broadcast %2 : vector<1x256xf32> to vector<4x256xf32>
    %25 = arith.mulf %23, %24 : vector<4x256xf32>
    %c240_i32 = arith.constant 240 : i32
    %26 = tpu.dynamic_rotate %20 by %c240_i32 dim 1 : vector<4x256xf32>, i32 -> vector<4x256xf32>
    %27 = vector.broadcast %3 : vector<1x256xf32> to vector<4x256xf32>
    %28 = arith.mulf %26, %27 : vector<4x256xf32>
    %29 = arith.maximumf %25, %28 : vector<4x256xf32>
    %30 = arith.maximumf %20, %29 : vector<4x256xf32>
    %c16_i32_10 = arith.constant 16 : i32
    %31 = tpu.dynamic_rotate %22 by %c16_i32_10 dim 1 : vector<4x256xf32>, i32 -> vector<4x256xf32>
    %32 = vector.broadcast %2 : vector<1x256xf32> to vector<4x256xf32>
    %33 = arith.mulf %31, %32 : vector<4x256xf32>
    %c240_i32_11 = arith.constant 240 : i32
    %34 = tpu.dynamic_rotate %22 by %c240_i32_11 dim 1 : vector<4x256xf32>, i32 -> vector<4x256xf32>
    %35 = vector.broadcast %3 : vector<1x256xf32> to vector<4x256xf32>
    %36 = arith.mulf %34, %35 : vector<4x256xf32>
    %37 = arith.minimumf %33, %36 : vector<4x256xf32>
    %38 = arith.minimumf %22, %37 : vector<4x256xf32>
    %39 = arith.subf %30, %38 : vector<4x256xf32>
    %c0_12 = arith.constant 0 : index
    %c0_13 = arith.constant 0 : index
    %40 = vector.load %arg4[%c0_12, %c0_13] : memref<4x256xf32, #tpu.memory_space<vmem>>, vector<4x256xf32>
    tpu.vector_store %arg4[%c0_12, %c0_13], %39 {strides = array<i32>} : memref<4x256xf32, #tpu.memory_space<vmem>>, vector<4x256xf32>,
    %c1_i32_14 = arith.constant 1 : i32
    %41 = tpu.dynamic_rotate %12 by %c1_i32_14 dim 1 : vector<4x256xf32>, i32 -> vector<4x256xf32>
    %42 = vector.broadcast %0 : vector<1x256xf32> to vector<4x256xf32>
    %43 = arith.mulf %41, %42 : vector<4x256xf32>
    %c255_i32_15 = arith.constant 255 : i32
    %44 = tpu.dynamic_rotate %12 by %c255_i32_15 dim 1 : vector<4x256xf32>, i32 -> vector<4x256xf32>
    %45 = vector.broadcast %1 : vector<1x256xf32> to vector<4x256xf32>
    %46 = arith.mulf %44, %45 : vector<4x256xf32>
    %47 = arith.maximumf %43, %46 : vector<4x256xf32>
    %48 = arith.maximumf %12, %47 : vector<4x256xf32>
    %49 = arith.minimumf %43, %46 : vector<4x256xf32>
    %50 = arith.minimumf %12, %49 : vector<4x256xf32>
    %c16_i32_16 = arith.constant 16 : i32
    %51 = tpu.dynamic_rotate %48 by %c16_i32_16 dim 1 : vector<4x256xf32>, i32 -> vector<4x256xf32>
    %52 = vector.broadcast %2 : vector<1x256xf32> to vector<4x256xf32>
    %53 = arith.mulf %51, %52 : vector<4x256xf32>
    %c240_i32_17 = arith.constant 240 : i32
    %54 = tpu.dynamic_rotate %48 by %c240_i32_17 dim 1 : vector<4x256xf32>, i32 -> vector<4x256xf32>
    %55 = vector.broadcast %3 : vector<1x256xf32> to vector<4x256xf32>
    %56 = arith.mulf %54, %55 : vector<4x256xf32>
    %57 = arith.maximumf %53, %56 : vector<4x256xf32>
    %58 = arith.maximumf %48, %57 : vector<4x256xf32>
    %c16_i32_18 = arith.constant 16 : i32
    %59 = tpu.dynamic_rotate %50 by %c16_i32_18 dim 1 : vector<4x256xf32>, i32 -> vector<4x256xf32>
    %60 = vector.broadcast %2 : vector<1x256xf32> to vector<4x256xf32>
    %61 = arith.mulf %59, %60 : vector<4x256xf32>
    %c240_i32_19 = arith.constant 240 : i32
    %62 = tpu.dynamic_rotate %50 by %c240_i32_19 dim 1 : vector<4x256xf32>, i32 -> vector<4x256xf32>
    %63 = vector.broadcast %3 : vector<1x256xf32> to vector<4x256xf32>
    %64 = arith.mulf %62, %63 : vector<4x256xf32>
    %65 = arith.minimumf %61, %64 : vector<4x256xf32>
    %66 = arith.minimumf %50, %65 : vector<4x256xf32>
    %67 = arith.subf %58, %66 : vector<4x256xf32>
    %c0_20 = arith.constant 0 : index
    %c0_21 = arith.constant 0 : index
    %68 = vector.load %arg5[%c0_20, %c0_21] : memref<4x256xf32, #tpu.memory_space<vmem>>, vector<4x256xf32>
    tpu.vector_store %arg5[%c0_20, %c0_21], %67 {strides = array<i32>} : memref<4x256xf32, #tpu.memory_space<vmem>>, vector<4x256xf32>,
    return
  }
  func.func @transform_0(%arg0: i32) -> (i32, i32) {
    %c0_i32 = arith.constant 0 : i32
    %c0_i32_0 = arith.constant 0 : i32
    %c0_i32_1 = arith.constant 0 : i32
    return %c0_i32, %c0_i32_0 : i32, i32
  }
  func.func @transform_1(%arg0: i32) -> (i32, i32) {
    %c0_i32 = arith.constant 0 : i32
    %c0_i32_0 = arith.constant 0 : i32
    %c0_i32_1 = arith.constant 0 : i32
    return %c0_i32, %c0_i32_0 : i32, i32
  }
  func.func @transform_2(%arg0: i32) -> (i32, i32) {
    %c0_i32 = arith.constant 0 : i32
    %c0_i32_0 = arith.constant 0 : i32
    %c0_i32_1 = arith.constant 0 : i32
    return %c0_i32, %c0_i32_0 : i32, i32
  }
  func.func @transform_3(%arg0: i32) -> (i32, i32) {
    %c0_i32 = arith.constant 0 : i32
    %c0_i32_0 = arith.constant 0 : i32
    %c0_i32_1 = arith.constant 0 : i32
    return %c0_i32, %c0_i32_0 : i32, i32
  }
  func.func @transform_4(%arg0: i32) -> (i32, i32) {
    %c0_i32 = arith.constant 0 : i32
    %c0_i32_0 = arith.constant 0 : i32
    %c0_i32_1 = arith.constant 0 : i32
    return %c0_i32, %c0_i32_0 : i32, i32
  }
}

</mosaic_0001>

<llo_original>
// kernel: squeeze.2
$region0: #{squeeze.2}
  %s0 = inlined_call_operand.vmem [shape: f32[1,4,16,16], index: 0, kind: input, shape index: {}]
  %s1 = inlined_call_operand.vmem [shape: f32[4,256], index: 1, kind: output, shape index: {}]
  $region1: #{squeeze.2} parent=0
    #allocation0 [shape = 'u8[8192]{0}', space=vmem, size = 0x2000, scoped, tag = 'scoped mem for output reshape']
    %v2 = vld [vmem:[%s0] ss:$8 sm:$0xf]
    %v3 = vld [vmem:[%s0] ss:$8 sm:$0xf0]
    %vm4 = vcmask 1047556
    %v5 = vsel %vm4, %v3, %v2
    %vm6 = vcmask 130048
    %7 = vst.msk [vmem:[#allocation0] ss:$8 sm:$0x3] %vm6, %v5
    %s8 = scalar_lea.vmem [#allocation0], 4294967281
    %9 = vst.msk [vmem:[%s8] ss:$8 sm:$0xc] %vm6, %v5
    %s10 = scalar_lea.vmem [#allocation0], 4294967266
    %11 = vst.msk [vmem:[%s10] ss:$8 sm:$0x30] %vm6, %v5
    %s12 = scalar_lea.vmem [#allocation0], 4294967251
    %13 = vst.msk [vmem:[%s12] ss:$8 sm:$0xc0] %vm6, %v5
    %s14 = scalar_lea.vmem %s0, 7
    %s15 = smov 3
    %v16 = vld [vmem:[%s14] ss:$16 sm:%s15]
    %s17 = scalar_lea.vmem %s0, 7
    %s18 = smov 12
    %v19 = vld [vmem:[%s17] ss:$16 sm:%s18]
    %vm20 = vcmask 1043458
    %v21 = vsel %vm20, %v19, %v16
    %s22 = scalar_lea.vmem %s0, 4294967247
    %s23 = smov 48
    %v24 = vld [vmem:[%s22] ss:$16 sm:%s23]
    %vm25 = vcmask 1045508
    %v26 = vsel %vm25, %v24, %v21
    %s27 = scalar_lea.vmem %s0, 4294967247
    %s28 = smov 192
    %v29 = vld [vmem:[%s27] ss:$16 sm:%s28]
    %vm30 = vcmask 1047558
    %v31 = vsel %vm30, %v29, %v26
    %32 = vrot.lane.b32.xlu0 %v31, 112
    %v33 = vpop.permute.xlu0 %32
    %vm34 = vcmask 1048448
    %35 = vst.msk [vmem:[#allocation0] sm:$0xf] %vm34, %v33
    %s36 = scalar_lea.vmem [#allocation0], 4
    %37 = vst.msk [vmem:[%s36] sm:$0xf0] %vm34, %v33
    %s38 = scalar_lea.vmem %s0, 6
    %s39 = smov 3
    %v40 = vld [vmem:[%s38] ss:$16 sm:%s39]
    %s41 = scalar_lea.vmem %s0, 6
    %s42 = smov 12
    %v43 = vld [vmem:[%s41] ss:$16 sm:%s42]
    %vm44 = vcmask 1043458
    %v45 = vsel %vm44, %v43, %v40
    %s46 = scalar_lea.vmem %s0, 4294967246
    %s47 = smov 48
    %v48 = vld [vmem:[%s46] ss:$16 sm:%s47]
    %vm49 = vcmask 1045508
    %v50 = vsel %vm49, %v48, %v45
    %s51 = scalar_lea.vmem %s0, 4294967246
    %s52 = smov 192
    %v53 = vld [vmem:[%s51] ss:$16 sm:%s52]
    %vm54 = vcmask 1047558
    %v55 = vsel %vm54, %v53, %v50
    %56 = vrot.lane.b32.xlu0 %v55, 96
    %v57 = vpop.permute.xlu0 %56
    %vm58 = vcmask 917248
    %59 = vst.msk [vmem:[#allocation0] sm:$0xf] %vm58, %v57
    %s60 = scalar_lea.vmem [#allocation0], 4
    %61 = vst.msk [vmem:[%s60] sm:$0xf0] %vm58, %v57
    %s62 = scalar_lea.vmem %s0, 5
    %s63 = smov 3
    %v64 = vld [vmem:[%s62] ss:$16 sm:%s63]
    %s65 = scalar_lea.vmem %s0, 5
    %s66 = smov 12
    %v67 = vld [vmem:[%s65] ss:$16 sm:%s66]
    %vm68 = vcmask 1043458
    %v69 = vsel %vm68, %v67, %v64
    %s70 = scalar_lea.vmem %s0, 4294967245
    %s71 = smov 48
    %v72 = vld [vmem:[%s70] ss:$16 sm:%s71]
    %vm73 = vcmask 1045508
    %v74 = vsel %vm73, %v72, %v69
    %s75 = scalar_lea.vmem %s0, 4294967245
    %s76 = smov 192
    %v77 = vld [vmem:[%s75] ss:$16 sm:%s76]
    %vm78 = vcmask 1047558
    %v79 = vsel %vm78, %v77, %v74
    %80 = vrot.lane.b32.xlu0 %v79, 80
    %v81 = vpop.permute.xlu0 %80
    %vm82 = vcmask 786048
    %83 = vst.msk [vmem:[#allocation0] sm:$0xf] %vm82, %v81
    %s84 = scalar_lea.vmem [#allocation0], 4
    %85 = vst.msk [vmem:[%s84] sm:$0xf0] %vm82, %v81
    %s86 = scalar_lea.vmem %s0, 4
    %s87 = smov 3
    %v88 = vld [vmem:[%s86] ss:$16 sm:%s87]
    %s89 = scalar_lea.vmem %s0, 4
    %s90 = smov 12
    %v91 = vld [vmem:[%s89] ss:$16 sm:%s90]
    %vm92 = vcmask 1043458
    %v93 = vsel %vm92, %v91, %v88
    %s94 = scalar_lea.vmem %s0, 4294967244
    %s95 = smov 48
    %v96 = vld [vmem:[%s94] ss:$16 sm:%s95]
    %vm97 = vcmask 1045508
    %v98 = vsel %vm97, %v96, %v93
    %s99 = scalar_lea.vmem %s0, 4294967244
    %s100 = smov 192
    %v101 = vld [vmem:[%s99] ss:$16 sm:%s100]
    %vm102 = vcmask 1047558
    %v103 = vsel %vm102, %v101, %v98
    %104 = vrot.lane.b32.xlu0 %v103, 64
    %v105 = vpop.permute.xlu0 %104
    %vm106 = vcmask 654848
    %107 = vst.msk [vmem:[#allocation0] sm:$0xf] %vm106, %v105
    %s108 = scalar_lea.vmem [#allocation0], 4
    %109 = vst.msk [vmem:[%s108] sm:$0xf0] %vm106, %v105
    %s110 = scalar_lea.vmem %s0, 3
    %s111 = smov 3
    %v112 = vld [vmem:[%s110] ss:$16 sm:%s111]
    %s113 = scalar_lea.vmem %s0, 3
    %s114 = smov 12
    %v115 = vld [vmem:[%s113] ss:$16 sm:%s114]
    %vm116 = vcmask 1043458
    %v117 = vsel %vm116, %v115, %v112
    %s118 = scalar_lea.vmem %s0, 4294967243
    %s119 = smov 48
    %v120 = vld [vmem:[%s118] ss:$16 sm:%s119]
    %vm121 = vcmask 1045508
    %v122 = vsel %vm121, %v120, %v117
    %s123 = scalar_lea.vmem %s0, 4294967243
    %s124 = smov 192
    %v125 = vld [vmem:[%s123] ss:$16 sm:%s124]
    %vm126 = vcmask 1047558
    %v127 = vsel %vm126, %v125, %v122
    %128 = vrot.lane.b32.xlu0 %v127, 48
    %v129 = vpop.permute.xlu0 %128
    %vm130 = vcmask 523648
    %131 = vst.msk [vmem:[#allocation0] sm:$0xf] %vm130, %v129
    %s132 = scalar_lea.vmem [#allocation0], 4
    %133 = vst.msk [vmem:[%s132] sm:$0xf0] %vm130, %v129
    %s134 = scalar_lea.vmem %s0, 2
    %s135 = smov 3
    %v136 = vld [vmem:[%s134] ss:$16 sm:%s135]
    %s137 = scalar_lea.vmem %s0, 2
    %s138 = smov 12
    %v139 = vld [vmem:[%s137] ss:$16 sm:%s138]
    %vm140 = vcmask 1043458
    %v141 = vsel %vm140, %v139, %v136
    %s142 = scalar_lea.vmem %s0, 4294967242
    %s143 = smov 48
    %v144 = vld [vmem:[%s142] ss:$16 sm:%s143]
    %vm145 = vcmask 1045508
    %v146 = vsel %vm145, %v144, %v141
    %s147 = scalar_lea.vmem %s0, 4294967242
    %s148 = smov 192
    %v149 = vld [vmem:[%s147] ss:$16 sm:%s148]
    %vm150 = vcmask 1047558
    %v151 = vsel %vm150, %v149, %v146
    %152 = vrot.lane.b32.xlu0 %v151, 32
    %v153 = vpop.permute.xlu0 %152
    %vm154 = vcmask 392448
    %155 = vst.msk [vmem:[#allocation0] sm:$0xf] %vm154, %v153
    %s156 = scalar_lea.vmem [#allocation0], 4
    %157 = vst.msk [vmem:[%s156] sm:$0xf0] %vm154, %v153
    %s158 = scalar_lea.vmem %s0, 1
    %s159 = smov 3
    %v160 = vld [vmem:[%s158] ss:$16 sm:%s159]
    %s161 = scalar_lea.vmem %s0, 1
    %s162 = smov 12
    %v163 = vld [vmem:[%s161] ss:$16 sm:%s162]
    %vm164 = vcmask 1043458
    %v165 = vsel %vm164, %v163, %v160
    %s166 = scalar_lea.vmem %s0, 4294967241
    %s167 = smov 48
    %v168 = vld [vmem:[%s166] ss:$16 sm:%s167]
    %vm169 = vcmask 1045508
    %v170 = vsel %vm169, %v168, %v165
    %s171 = scalar_lea.vmem %s0, 4294967241
    %s172 = smov 192
    %v173 = vld [vmem:[%s171] ss:$16 sm:%s172]
    %vm174 = vcmask 1047558
    %v175 = vsel %vm174, %v173, %v170
    %176 = vrot.lane.b32.xlu0 %v175, 16
    %v177 = vpop.permute.xlu0 %176
    %vm178 = vcmask 261248
    %179 = vst.msk [vmem:[#allocation0] sm:$0xf] %vm178, %v177
    %s180 = scalar_lea.vmem [#allocation0], 4
    %181 = vst.msk [vmem:[%s180] sm:$0xf0] %vm178, %v177
    %s183 = sshll.u32 1, 4
    %s184 = ssub.s32 %s183, 1
    %v186 = vld [vmem:[#allocation0] sm:%s184]
    %s187 = sshll.u32 1, 4
    %s188 = ssub.s32 %s187, 1
    %189 = vst [vmem:[%s1] sm:%s188] %v186
    %s190 = scalar_lea.vmem [#allocation0], 8
    %v191 = vld [vmem:[%s190] sm:%s184]
    %s192 = sshll.u32 1, 4
    %s193 = ssub.s32 %s192, 1
    %s194 = scalar_lea.vmem %s1, 4
    %195 = vst [vmem:[%s194] sm:%s193] %v191

// kernel: mul_scale_bound_loss.3
$region0: #{mul_scale_bound_loss.3}
  #allocation0 [shape = 'u32[]', space=smem, size = 0x4, offset = 0x4, fixed_abs, tag = 'smem constant byte address 0x4 - core index']
  #allocation1 [shape = 'u32[144,128]{1,0:T(1,128)}', space=vmem, size = 0x12000, scoped, tag = 'internal scratch']
  %s0 = inlined_call_operand.vmem [shape: f32[4,256], index: 0, kind: input, shape index: {}]
  %s1 = inlined_call_operand.vmem [shape: f32[4,256], index: 1, kind: input, shape index: {}]
  %s2 = inlined_call_operand.vmem [shape: f32[4,256], index: 2, kind: input, shape index: {}]
  %s3 = inlined_call_operand.vmem [shape: f32[4,256], index: 3, kind: output, shape index: {0}]
  %s4 = inlined_call_operand.vmem [shape: f32[4,256], index: 4, kind: output, shape index: {1}]
  %5 = xla_tuple %s3, %s4
  %s6 = sld [smem:[#allocation0]]
  $region30: #{mul_scale_bound_loss.3} parent=0
    _
  %s8 = ssub.s32 1, %s6
  %s9 = scalar_select 0, %s8, %s6
  // Predicated region
  $region2: #{mul_scale_bound_loss.3} parent=0 // pred_check
    _
  $region3: #{mul_scale_bound_loss.3} parent=0 // pred_check_branch
    %11 = sbr.rel (0) target = $region5
  $region4: #{mul_scale_bound_loss.3} parent=0 // pred_region
    _
  $region5: #{mul_scale_bound_loss.3} parent=0 // pred_fallthru
    _
  // Predicated region
  $region6: #{mul_scale_bound_loss.3} parent=0 // pred_check
    _
  $region7: #{mul_scale_bound_loss.3} parent=0 // pred_check_branch
    %13 = sbr.rel (0) target = $region9
  $region8: #{mul_scale_bound_loss.3} parent=0 // pred_region
    _
  $region9: #{mul_scale_bound_loss.3} parent=0 // pred_fallthru
    _
  // Predicated region
  $region10: #{mul_scale_bound_loss.3} parent=0 // pred_check
    _
  $region11: #{mul_scale_bound_loss.3} parent=0 // pred_check_branch
    %15 = sbr.rel (0) target = $region13
  $region12: #{mul_scale_bound_loss.3} parent=0 // pred_region
    _
  $region13: #{mul_scale_bound_loss.3} parent=0 // pred_fallthru
    _
  %v16 = vld [vmem:[%s0] ss:$4 sm:$0x3]
  %s17 = scalar_lea.vmem %s0, 1
  %v18 = vld [vmem:[%s17] ss:$4 sm:$0x3]
  %s19 = scalar_lea.vmem %s0, 2
  %v20 = vld [vmem:[%s19] ss:$4 sm:$0x3]
  %s21 = scalar_lea.vmem %s0, 3
  %v22 = vld [vmem:[%s21] ss:$4 sm:$0x3]
  %v23 = vld [vmem:[%s1] sm:$0xff]
  %v24 = vld [vmem:[%s2] sm:$0xff]
  %v25 = vsub.f32 0.0, %v24
  %v26 = vmul.f32 %v25, 1.442695
  %v27 = vpow.pop %v26
  %v28 = vadd.f32 %v27, 1.0
  %v29 = vrcp.pop %v28
  %v30 = vmul.f32 1.0, %v29
  %v32 = vcombine.high %v23, %v23
  %34 = vrot.lane.b32.xlu0 %v23, 1
  %v35 = vpop.permute.xlu0 %34
  %36 = vrot.lane.b32.xlu0 %v32, 1
  %v37 = vpop.permute.xlu0 %36
  %v38 = vlaneseq
  %v39 = vand.u32 %v38, 127
  %vm40 = vcmp.lt.s32.totalorder %v39, 1
  %v41 = vsel %vm40, %v35, %v37
  %v42 = vsel %vm40, %v37, %v35
  %v44 = vlaneseq
  %v45 = vshrl.u32 %v44, 7
  %v46 = vsub.s32 0, %v45
  %v47 = vrot.slane %v16, %v46
  %v48 = vlaneseq
  %v49 = vshrl.u32 %v48, 7
  %v50 = vsub.s32 1, %v49
  %v51 = vrot.slane %v16, %v50
  %v54 = vmul.f32 %v42, %v47
  %v55 = vmul.f32 %v41, %v51
  %56 = vrot.lane.b32.xlu0 %v23, 127
  %v57 = vpop.permute.xlu0 %56
  %58 = vrot.lane.b32.xlu0 %v32, 127
  %v59 = vpop.permute.xlu0 %58
  %vm60 = vcmp.lt.s32.totalorder %v39, 127
  %v61 = vsel %vm60, %v57, %v59
  %v62 = vsel %vm60, %v59, %v57
  %v64 = vlaneseq
  %v65 = vshrl.u32 %v64, 7
  %v66 = vsub.s32 0, %v65
  %v67 = vrot.slane %v18, %v66
  %v68 = vlaneseq
  %v69 = vshrl.u32 %v68, 7
  %v70 = vsub.s32 1, %v69
  %v71 = vrot.slane %v18, %v70
  %v74 = vmul.f32 %v61, %v67
  %v75 = vmul.f32 %v62, %v71
  %v76 = vmax.f32 %v54, %v74
  %v77 = vmax.f32 %v55, %v75
  %v80 = vcombine.low %v76, %v77
  %v82 = vmax.f32 %v23, %v80
  %v83 = vmin.f32 %v54, %v74
  %v84 = vmin.f32 %v55, %v75
  %v87 = vcombine.low %v83, %v84
  %v89 = vmin.f32 %v23, %v87
  %v91 = vcombine.high %v82, %v82
  %93 = vrot.lane.b32.xlu0 %v82, 16
  %v94 = vpop.permute.xlu0 %93
  %95 = vrot.lane.b32.xlu0 %v91, 16
  %v96 = vpop.permute.xlu0 %95
  %vm97 = vcmp.lt.s32.totalorder %v39, 16
  %v98 = vsel %vm97, %v94, %v96
  %v99 = vsel %vm97, %v96, %v94
  %v101 = vlaneseq
  %v102 = vshrl.u32 %v101, 7
  %v103 = vsub.s32 0, %v102
  %v104 = vrot.slane %v20, %v103
  %v105 = vlaneseq
  %v106 = vshrl.u32 %v105, 7
  %v107 = vsub.s32 1, %v106
  %v108 = vrot.slane %v20, %v107
  %v111 = vmul.f32 %v99, %v104
  %v112 = vmul.f32 %v98, %v108
  %113 = vrot.lane.b32.xlu0 %v82, 112
  %v114 = vpop.permute.xlu0 %113
  %115 = vrot.lane.b32.xlu0 %v91, 112
  %v116 = vpop.permute.xlu0 %115
  %vm117 = vcmp.lt.s32.totalorder %v39, 112
  %v118 = vsel %vm117, %v114, %v116
  %v119 = vsel %vm117, %v116, %v114
  %v121 = vlaneseq
  %v122 = vshrl.u32 %v121, 7
  %v123 = vsub.s32 0, %v122
  %v124 = vrot.slane %v22, %v123
  %v125 = vlaneseq
  %v126 = vshrl.u32 %v125, 7
  %v127 = vsub.s32 1, %v126
  %v128 = vrot.slane %v22, %v127
  %v131 = vmul.f32 %v118, %v124
  %v132 = vmul.f32 %v119, %v128
  %v133 = vmax.f32 %v111, %v131
  %v134 = vmax.f32 %v112, %v132
  %v137 = vcombine.low %v133, %v134
  %v139 = vmax.f32 %v82, %v137
  %v141 = vcombine.high %v89, %v89
  %143 = vrot.lane.b32.xlu0 %v89, 16
  %v144 = vpop.permute.xlu0 %143
  %145 = vrot.lane.b32.xlu0 %v141, 16
  %v146 = vpop.permute.xlu0 %145
  %v147 = vsel %vm97, %v144, %v146
  %v148 = vsel %vm97, %v146, %v144
  %v149 = vmul.f32 %v148, %v104
  %v150 = vmul.f32 %v147, %v108
  %151 = vrot.lane.b32.xlu0 %v89, 112
  %v152 = vpop.permute.xlu0 %151
  %153 = vrot.lane.b32.xlu0 %v141, 112
  %v154 = vpop.permute.xlu0 %153
  %v155 = vsel %vm117, %v152, %v154
  %v156 = vsel %vm117, %v154, %v152
  %v157 = vmul.f32 %v155, %v124
  %v158 = vmul.f32 %v156, %v128
  %v159 = vmin.f32 %v149, %v157
  %v160 = vmin.f32 %v150, %v158
  %v163 = vcombine.low %v159, %v160
  %v165 = vmin.f32 %v89, %v163
  %v166 = vsub.f32 %v139, %v165
  %167 = vst [vmem:[%s3] sm:$0xff] %v166
  %v169 = vcombine.high %v30, %v30
  %171 = vrot.lane.b32.xlu0 %v30, 1
  %v172 = vpop.permute.xlu0 %171
  %173 = vrot.lane.b32.xlu0 %v169, 1
  %v174 = vpop.permute.xlu0 %173
  %v175 = vsel %vm40, %v172, %v174
  %v176 = vsel %vm40, %v174, %v172
  %v177 = vmul.f32 %v176, %v47
  %v178 = vmul.f32 %v175, %v51
  %179 = vrot.lane.b32.xlu0 %v30, 127
  %v180 = vpop.permute.xlu0 %179
  %181 = vrot.lane.b32.xlu0 %v169, 127
  %v182 = vpop.permute.xlu0 %181
  %v183 = vsel %vm60, %v180, %v182
  %v184 = vsel %vm60, %v182, %v180
  %v185 = vmul.f32 %v183, %v67
  %v186 = vmul.f32 %v184, %v71
  %v187 = vmax.f32 %v177, %v185
  %v188 = vmax.f32 %v178, %v186
  %v191 = vcombine.low %v187, %v188
  %v193 = vmax.f32 %v30, %v191
  %v194 = vmin.f32 %v177, %v185
  %v195 = vmin.f32 %v178, %v186
  %v198 = vcombine.low %v194, %v195
  %v200 = vmin.f32 %v30, %v198
  %v202 = vcombine.high %v193, %v193
  %204 = vrot.lane.b32.xlu0 %v193, 16
  %v205 = vpop.permute.xlu0 %204
  %206 = vrot.lane.b32.xlu0 %v202, 16
  %v207 = vpop.permute.xlu0 %206
  %v208 = vsel %vm97, %v205, %v207
  %v209 = vsel %vm97, %v207, %v205
  %v210 = vmul.f32 %v209, %v104
  %v211 = vmul.f32 %v208, %v108
  %212 = vrot.lane.b32.xlu0 %v193, 112
  %v213 = vpop.permute.xlu0 %212
  %214 = vrot.lane.b32.xlu0 %v202, 112
  %v215 = vpop.permute.xlu0 %214
  %v216 = vsel %vm117, %v213, %v215
  %v217 = vsel %vm117, %v215, %v213
  %v218 = vmul.f32 %v216, %v124
  %v219 = vmul.f32 %v217, %v128
  %v220 = vmax.f32 %v210, %v218
  %v221 = vmax.f32 %v211, %v219
  %v224 = vcombine.low %v220, %v221
  %v226 = vmax.f32 %v193, %v224
  %v228 = vcombine.high %v200, %v200
  %230 = vrot.lane.b32.xlu0 %v200, 16
  %v231 = vpop.permute.xlu0 %230
  %232 = vrot.lane.b32.xlu0 %v228, 16
  %v233 = vpop.permute.xlu0 %232
  %v234 = vsel %vm97, %v231, %v233
  %v235 = vsel %vm97, %v233, %v231
  %v236 = vmul.f32 %v235, %v104
  %v237 = vmul.f32 %v234, %v108
  %238 = vrot.lane.b32.xlu0 %v200, 112
  %v239 = vpop.permute.xlu0 %238
  %240 = vrot.lane.b32.xlu0 %v228, 112
  %v241 = vpop.permute.xlu0 %240
  %v242 = vsel %vm117, %v239, %v241
  %v243 = vsel %vm117, %v241, %v239
  %v244 = vmul.f32 %v242, %v124
  %v245 = vmul.f32 %v243, %v128
  %v246 = vmin.f32 %v236, %v244
  %v247 = vmin.f32 %v237, %v245
  %v250 = vcombine.low %v246, %v247
  %v252 = vmin.f32 %v200, %v250
  %v253 = vsub.f32 %v226, %v252
  %254 = vst [vmem:[%s4] sm:$0xff] %v253
  // Predicated region
  $region14: #{mul_scale_bound_loss.3} parent=0 // pred_check
    _
  $region15: #{mul_scale_bound_loss.3} parent=0 // pred_check_branch
    %256 = sbr.rel (0) target = $region17
  $region16: #{mul_scale_bound_loss.3} parent=0 // pred_region
    _
  $region17: #{mul_scale_bound_loss.3} parent=0 // pred_fallthru
    _
  // Predicated region
  $region18: #{mul_scale_bound_loss.3} parent=0 // pred_check
    _
  $region19: #{mul_scale_bound_loss.3} parent=0 // pred_check_branch
    %258 = sbr.rel (0) target = $region21
  $region20: #{mul_scale_bound_loss.3} parent=0 // pred_region
    _
  $region21: #{mul_scale_bound_loss.3} parent=0 // pred_fallthru
    _
  // Predicated region
  $region22: #{mul_scale_bound_loss.3} parent=0 // pred_check
    _
  $region23: #{mul_scale_bound_loss.3} parent=0 // pred_check_branch
    %260 = sbr.rel (0) target = $region25
  $region24: #{mul_scale_bound_loss.3} parent=0 // pred_region
    _
  $region25: #{mul_scale_bound_loss.3} parent=0 // pred_fallthru
    _
  // Predicated region
  $region26: #{mul_scale_bound_loss.3} parent=0 // pred_check
    _
  $region27: #{mul_scale_bound_loss.3} parent=0 // pred_check_branch
    %262 = sbr.rel (0) target = $region29
  $region28: #{mul_scale_bound_loss.3} parent=0 // pred_region
    _
  $region29: #{mul_scale_bound_loss.3} parent=0 // pred_fallthru
    _

// kernel: mul_scale_bound_loss.2
$region0: #{mul_scale_bound_loss.2}
  #allocation0 [shape = 'u32[]', space=smem, size = 0x4, offset = 0x4, fixed_abs, tag = 'smem constant byte address 0x4 - core index']
  #allocation1 [shape = 'u32[144,128]{1,0:T(1,128)}', space=vmem, size = 0x12000, scoped, tag = 'internal scratch']
  #allocation2 [shape = 'f32[8,256]{1,0:T(8,128)}', space=vmem, size = 0x2000, scoped, tag = 'scratch operand']
  #allocation3 [shape = 'f32[8,1]{1,0:T(8,128)}', space=vmem, size = 0x1000, scoped, tag = 'scratch operand']
  #allocation4 [shape = 'f32[8,1]{1,0:T(8,128)}', space=vmem, size = 0x1000, scoped, tag = 'scratch operand']
  %s0 = inlined_call_operand.vmem [shape: f32[4,256], index: 0, kind: input, shape index: {}]
  %s1 = inlined_call_operand.vmem [shape: f32[8,256], index: 1, kind: input, shape index: {}]
  %s2 = inlined_call_operand.vmem [shape: f32[3,8,256], index: 2, kind: input, shape index: {}]
  %s3 = inlined_call_operand.vmem [shape: f32[8,1], index: 3, kind: output, shape index: {0}]
  %s4 = inlined_call_operand.vmem [shape: f32[8,1], index: 4, kind: output, shape index: {1}]
  %5 = xla_tuple %s3, %s4
  %s6 = sld [smem:[#allocation0]]
  $region57: #{mul_scale_bound_loss.2} parent=0
    _
  %s8 = ssub.s32 1, %s6
  %s9 = scalar_select 0, %s8, %s6
  loop: start=0, step=1, limit=5
  $region2: #{mul_scale_bound_loss.2} parent=0 // loop_pre_header
    _
  $region3: #{mul_scale_bound_loss.2} parent=0 // loop_header
    %s11 = sphi 0, %s15
    %p12 = scmp.ge.s32.totalorder %s11, 5
    %s18 = sphi 0, %s30
    %s19 = sphi 0, %s26
    %s20 = sphi 0, %s18
    %s21 = sphi 0, %s19
    %s22 = sphi 0, %s20
    %s23 = sphi 0, %s21
    %s31 = sphi 0, %s31
    %s33 = sphi 0, %s31
    %s34 = sphi 0, %s33
    %s48 = sphi 0, %s34
    %s54 = sphi 0, %s56
    %s57 = sphi 0, %s54
    %s58 = sphi 0, %s57
    %s74 = sphi 0, %s58
    %s82 = sphi 0, %s84
    %s85 = sphi 0, %s82
    %s86 = sphi 0, %s85
    %s102 = sphi 0, %s86
    %s108 = sphi 0, %s110
    %s111 = sphi 0, %s108
    %s112 = sphi 0, %s111
    %s128 = sphi 0, %s112
    %s134 = sphi 0, %s136
    %s137 = sphi 0, %s134
    %s138 = sphi 0, %s137
    %s154 = sphi 0, %s138
  $region4: #{mul_scale_bound_loss.2} parent=0 // loop_header_branch
    %14 = sbr.rel (%p12) target = $region8
  $region5: #{mul_scale_bound_loss.2} parent=0 // loop_body
    %s16 = ssub.s32 %s11, 1
    %s17 = ssub.s32 %s11, 2
    %s24 = sadd.s32 1, %s19
    %p25 = scmp.ge.s32.totalorder %s24, 3
    %s26 = scalar_select %p25, 0, %s24
    %s27 = sadd.s32 1, %s18
    %s28 = scalar_select %p25, %s27, %s18
    %p29 = scmp.ge.s32.totalorder %s28, 1
    %s30 = scalar_select %p29, 0, %s28
    %s32 = sadd.s32 %s31, 1
    %p35 = scmp.eq.s32.totalorder %s11, 2
    %p36 = scmp.ne.s32.totalorder %s31, %s33
    %p37 = scmp.eq.s32.totalorder %s11, 0
    %p38 = por %p36, %p37
    %p39 = scmp.ne.s32.totalorder %s31, %s33
    %p40 = scmp.eq.s32.totalorder %s16, 2
    %p41 = por %p39, %p40
    %p42 = scmp.ne.s32.totalorder %s33, %s34
    %p43 = scmp.eq.s32.totalorder %s16, 0
    %p44 = por %p42, %p43
    %p45 = scmp.ne.s32.totalorder %s33, %s34
    %p46 = scmp.eq.s32.totalorder %s17, 2
    %p47 = por %p45, %p46
    %p49 = scmp.ne.s32.totalorder %s34, %s48
    %p50 = scmp.eq.s32.totalorder %s17, 0
    %p51 = por %p49, %p50
    %s52 = ssub.s32 %s18, %s30
    %p53 = scmp.eq.s32.totalorder %s52, 0
    %s55 = sadd.s32 %s54, 1
    %s56 = scalar_select %p53, %s54, %s55
    %p59 = pneg %p53
    %p60 = scmp.eq.s32.totalorder %s11, 2
    %p61 = por %p59, %p60
    %p62 = scmp.ne.s32.totalorder %s54, %s57
    %p63 = scmp.eq.s32.totalorder %s11, 0
    %p64 = por %p62, %p63
    %p65 = scmp.ne.s32.totalorder %s54, %s57
    %p66 = scmp.eq.s32.totalorder %s16, 2
    %p67 = por %p65, %p66
    %p68 = scmp.ne.s32.totalorder %s57, %s58
    %p69 = scmp.eq.s32.totalorder %s16, 0
    %p70 = por %p68, %p69
    %p71 = scmp.ne.s32.totalorder %s57, %s58
    %p72 = scmp.eq.s32.totalorder %s17, 2
    %p73 = por %p71, %p72
    %p75 = scmp.ne.s32.totalorder %s58, %s74
    %p76 = scmp.eq.s32.totalorder %s17, 0
    %p77 = por %p75, %p76
    %s78 = ssub.s32 %s19, %s26
    %s79 = ssub.s32 %s18, %s30
    %s80 = sor.u32 %s78, %s79
    %p81 = scmp.eq.s32.totalorder %s80, 0
    %s83 = sadd.s32 %s82, 1
    %s84 = scalar_select %p81, %s82, %s83
    %p87 = pneg %p81
    %p88 = scmp.eq.s32.totalorder %s11, 2
    %p89 = por %p87, %p88
    %p90 = scmp.ne.s32.totalorder %s82, %s85
    %p91 = scmp.eq.s32.totalorder %s11, 0
    %p92 = por %p90, %p91
    %p93 = scmp.ne.s32.totalorder %s82, %s85
    %p94 = scmp.eq.s32.totalorder %s16, 2
    %p95 = por %p93, %p94
    %p96 = scmp.ne.s32.totalorder %s85, %s86
    %p97 = scmp.eq.s32.totalorder %s16, 0
    %p98 = por %p96, %p97
    %p99 = scmp.ne.s32.totalorder %s85, %s86
    %p100 = scmp.eq.s32.totalorder %s17, 2
    %p101 = por %p99, %p100
    %p103 = scmp.ne.s32.totalorder %s86, %s102
    %p104 = scmp.eq.s32.totalorder %s17, 0
    %p105 = por %p103, %p104
    %s106 = ssub.s32 %s18, %s30
    %p107 = scmp.eq.s32.totalorder %s106, 0
    %s109 = sadd.s32 %s108, 1
    %s110 = scalar_select %p107, %s108, %s109
    %p113 = pneg %p107
    %p114 = scmp.eq.s32.totalorder %s11, 2
    %p115 = por %p113, %p114
    %p116 = scmp.ne.s32.totalorder %s108, %s111
    %p117 = scmp.eq.s32.totalorder %s11, 0
    %p118 = por %p116, %p117
    %p119 = scmp.ne.s32.totalorder %s108, %s111
    %p120 = scmp.eq.s32.totalorder %s16, 2
    %p121 = por %p119, %p120
    %p122 = scmp.ne.s32.totalorder %s111, %s112
    %p123 = scmp.eq.s32.totalorder %s16, 0
    %p124 = por %p122, %p123
    %p125 = scmp.ne.s32.totalorder %s111, %s112
    %p126 = scmp.eq.s32.totalorder %s17, 2
    %p127 = por %p125, %p126
    %p129 = scmp.ne.s32.totalorder %s112, %s128
    %p130 = scmp.eq.s32.totalorder %s17, 0
    %p131 = por %p129, %p130
    %s132 = ssub.s32 %s18, %s30
    %p133 = scmp.eq.s32.totalorder %s132, 0
    %s135 = sadd.s32 %s134, 1
    %s136 = scalar_select %p133, %s134, %s135
    %p139 = pneg %p133
    %p140 = scmp.eq.s32.totalorder %s11, 2
    %p141 = por %p139, %p140
    %p142 = scmp.ne.s32.totalorder %s134, %s137
    %p143 = scmp.eq.s32.totalorder %s11, 0
    %p144 = por %p142, %p143
    %p145 = scmp.ne.s32.totalorder %s134, %s137
    %p146 = scmp.eq.s32.totalorder %s16, 2
    %p147 = por %p145, %p146
    %p148 = scmp.ne.s32.totalorder %s137, %s138
    %p149 = scmp.eq.s32.totalorder %s16, 0
    %p150 = por %p148, %p149
    %p151 = scmp.ne.s32.totalorder %s137, %s138
    %p152 = scmp.eq.s32.totalorder %s17, 2
    %p153 = por %p151, %p152
    %p155 = scmp.ne.s32.totalorder %s138, %s154
    %p156 = scmp.eq.s32.totalorder %s17, 0
    %p157 = por %p155, %p156
    %p158 = scmp.le.s32.totalorder 1, %s11
    %p159 = scmp.lt.s32.totalorder %s11, 4
    %p160 = pnand %p158, %p159
    %p161 = pneg %p160
    // Predicated region
    $region9: #{mul_scale_bound_loss.2} parent=5 // pred_check
      _
    $region10: #{mul_scale_bound_loss.2} parent=5 // pred_check_branch
      %163 = sbr.rel (%p160) target = $region12
    $region11: #{mul_scale_bound_loss.2} parent=5 // pred_region
      %s164 = ssub.s32 %s11, 1
      // Predicated region
      $region13: #{mul_scale_bound_loss.2} parent=11 // pred_check
        %p165 = pneg %p44
      $region14: #{mul_scale_bound_loss.2} parent=11 // pred_check_branch
        %167 = sbr.rel (%p165) target = $region16
      $region15: #{mul_scale_bound_loss.2} parent=11 // pred_region
        _
      $region16: #{mul_scale_bound_loss.2} parent=11 // pred_fallthru
        _
      // Predicated region
      $region17: #{mul_scale_bound_loss.2} parent=11 // pred_check
        %p168 = pneg %p70
      $region18: #{mul_scale_bound_loss.2} parent=11 // pred_check_branch
        %170 = sbr.rel (%p168) target = $region20
      $region19: #{mul_scale_bound_loss.2} parent=11 // pred_region
        %p171 = scmp.lt.s32.totalorder %s20, 0
        %s172 = scalar_select %p171, %s20, 0
        %s173 = smul.addr %s172, 2
        %s174 = smul.addr %s173, 8
        %s175 = scalar_lea.vmem %s1, %s174
      $region20: #{mul_scale_bound_loss.2} parent=11 // pred_fallthru
        _
    $region12: #{mul_scale_bound_loss.2} parent=5 // pred_fallthru
      _
    %p176 = scmp.lt.s32.totalorder %s11, 3
    // Predicated region
    $region21: #{mul_scale_bound_loss.2} parent=5 // pred_check
      %p177 = pneg %p176
    $region22: #{mul_scale_bound_loss.2} parent=5 // pred_check_branch
      %179 = sbr.rel (%p177) target = $region24
    $region23: #{mul_scale_bound_loss.2} parent=5 // pred_region
      // Predicated region
      $region25: #{mul_scale_bound_loss.2} parent=23 // pred_check
        %p180 = pneg %p92
      $region26: #{mul_scale_bound_loss.2} parent=23 // pred_check_branch
        %182 = sbr.rel (%p180) target = $region28
      $region27: #{mul_scale_bound_loss.2} parent=23 // pred_region
        %p183 = scmp.lt.s32.totalorder %s19, 2
        %s184 = scalar_select %p183, %s19, 2
        %p185 = scmp.lt.s32.totalorder %s18, 0
        %s186 = scalar_select %p185, %s18, 0
        %s187 = smul.addr %s186, 2
        %s188 = smul.addr %s184, 2
        %s189 = sadd.s32 %s187, %s188
        %s190 = smul.addr %s189, 8
        %s191 = scalar_lea.vmem %s2, %s190
      $region28: #{mul_scale_bound_loss.2} parent=23 // pred_fallthru
        _
    $region24: #{mul_scale_bound_loss.2} parent=5 // pred_fallthru
      _
    %p192 = scmp.le.s32.totalorder 1, %s11
    %p193 = scmp.lt.s32.totalorder %s11, 4
    %p194 = pnand %p192, %p193
    %p195 = pneg %p194
    // Predicated region
    $region29: #{mul_scale_bound_loss.2} parent=5 // pred_check
      _
    $region30: #{mul_scale_bound_loss.2} parent=5 // pred_check_branch
      %197 = sbr.rel (%p194) target = $region32
    $region31: #{mul_scale_bound_loss.2} parent=5 // pred_region
      %s198 = ssub.s32 %s11, 1
      %p199 = pneg %p44
      %p200 = pneg %p41
      %p201 = scmp.lt.s32.totalorder %s20, 0
      %s202 = scalar_select %p201, %s20, 0
      %s203 = smul.addr %s202, 2
      %s204 = smul.addr %s203, 8
      %s205 = scalar_lea.vmem %s1, %s204
      %p206 = pneg %p70
      %p207 = pneg %p67
      %p208 = scmp.lt.s32.totalorder %s21, 2
      %s209 = scalar_select %p208, %s21, 2
      %p210 = scmp.lt.s32.totalorder %s20, 0
      %s211 = scalar_select %p210, %s20, 0
      %s212 = smul.addr %s211, 2
      %s213 = smul.addr %s209, 2
      %s214 = sadd.s32 %s212, %s213
      %s215 = smul.addr %s214, 8
      %s216 = scalar_lea.vmem %s2, %s215
      %p217 = pneg %p98
      %p218 = pneg %p95
      %p219 = pneg %p124
      %p220 = pneg %p121
      %p221 = scmp.lt.s32.totalorder %s20, 0
      %s222 = scalar_select %p221, %s20, 0
      %s223 = smul.addr %s222, 8
      %s224 = scalar_lea.vmem %s3, %s223
      %p225 = pneg %p150
      %p226 = pneg %p147
      %p227 = scmp.lt.s32.totalorder %s20, 0
      %s228 = scalar_select %p227, %s20, 0
      %s229 = smul.addr %s228, 8
      %s230 = scalar_lea.vmem %s4, %s229
      %p231 = scmp.lt.s32.totalorder %s20, 0
      %s232 = scalar_select %p231, %s20, 0
      %s233 = smul.addr %s232, 2
      %s234 = smul.addr %s233, 8
      %s235 = scalar_lea.vmem %s1, %s234
      %p236 = scmp.lt.s32.totalorder %s21, 2
      %s237 = scalar_select %p236, %s21, 2
      %p238 = scmp.lt.s32.totalorder %s20, 0
      %s239 = scalar_select %p238, %s20, 0
      %s240 = smul.addr %s239, 2
      %s241 = smul.addr %s237, 2
      %s242 = sadd.s32 %s240, %s241
      %s243 = smul.addr %s242, 8
      %s244 = scalar_lea.vmem %s2, %s243
      %p245 = scmp.lt.s32.totalorder %s20, 0
      %s246 = scalar_select %p245, %s20, 0
      %s247 = smul.addr %s246, 8
      %s248 = scalar_lea.vmem %s3, %s247
      %p249 = scmp.lt.s32.totalorder %s20, 0
      %s250 = scalar_select %p249, %s20, 0
      %s251 = smul.addr %s250, 8
      %s252 = scalar_lea.vmem %s4, %s251
      %v253 = vld [vmem:[%s0] ss:$4 sm:$0x3]
      %s254 = scalar_lea.vmem %s0, 1
      %v255 = vld [vmem:[%s254] ss:$4 sm:$0x3]
      %s256 = scalar_lea.vmem %s0, 2
      %v257 = vld [vmem:[%s256] ss:$4 sm:$0x3]
      %s258 = scalar_lea.vmem %s0, 3
      %v259 = vld [vmem:[%s258] ss:$4 sm:$0x3]
      %v260 = vld [vmem:[%s235] sm:$0xff]
      %v261 = vld [vmem:[%s235 + $0x8] sm:$0xff]
      %v262 = vld [vmem:[%s244] sm:$0xff]
      %v263 = vld [vmem:[%s244 + $0x8] sm:$0xff]
      %v264 = vsub.f32 0.0, %v262
      %v265 = vsub.f32 0.0, %v263
      %v266 = vmul.f32 %v264, 1.442695
      %v267 = vpow.pop %v266
      %v268 = vmul.f32 %v265, 1.442695
      %v269 = vpow.pop %v268
      %v270 = vadd.f32 %v267, 1.0
      %v271 = vadd.f32 %v269, 1.0
      %v272 = vrcp.pop %v270
      %v273 = vmul.f32 1.0, %v272
      %v274 = vrcp.pop %v271
      %v275 = vmul.f32 1.0, %v274
      %276 = vrot.lane.b32.xlu0 %v273, 1
      %v277 = vpop.permute.xlu0 %276
      %278 = vrot.lane.b32.xlu0 %v275, 1
      %v279 = vpop.permute.xlu0 %278
      %v280 = vlaneseq
      %v281 = vand.u32 %v280, 127
      %vm282 = vcmp.lt.s32.totalorder %v281, 1
      %v283 = vsel %vm282, %v277, %v279
      %v284 = vsel %vm282, %v279, %v277
      %v286 = vlaneseq
      %v287 = vshrl.u32 %v286, 7
      %v288 = vsub.s32 0, %v287
      %v289 = vrot.slane %v253, %v288
      %v290 = vlaneseq
      %v291 = vshrl.u32 %v290, 7
      %v292 = vsub.s32 1, %v291
      %v293 = vrot.slane %v253, %v292
      %v296 = vmul.f32 %v284, %v289
      %v297 = vmul.f32 %v283, %v293
      %298 = vrot.lane.b32.xlu0 %v273, 127
      %v299 = vpop.permute.xlu0 %298
      %300 = vrot.lane.b32.xlu0 %v275, 127
      %v301 = vpop.permute.xlu0 %300
      %vm302 = vcmp.lt.s32.totalorder %v281, 127
      %v303 = vsel %vm302, %v299, %v301
      %v304 = vsel %vm302, %v301, %v299
      %v306 = vlaneseq
      %v307 = vshrl.u32 %v306, 7
      %v308 = vsub.s32 0, %v307
      %v309 = vrot.slane %v255, %v308
      %v310 = vlaneseq
      %v311 = vshrl.u32 %v310, 7
      %v312 = vsub.s32 1, %v311
      %v313 = vrot.slane %v255, %v312
      %v316 = vmul.f32 %v303, %v309
      %v317 = vmul.f32 %v304, %v313
      %v318 = vmax.f32 %v296, %v316
      %v319 = vmax.f32 %v297, %v317
      %v320 = vmax.f32 %v273, %v318
      %v321 = vmax.f32 %v275, %v319
      %v322 = vmin.f32 %v296, %v316
      %v323 = vmin.f32 %v297, %v317
      %v324 = vmin.f32 %v273, %v322
      %v325 = vmin.f32 %v275, %v323
      %326 = vrot.lane.b32.xlu0 %v320, 16
      %v327 = vpop.permute.xlu0 %326
      %328 = vrot.lane.b32.xlu0 %v321, 16
      %v329 = vpop.permute.xlu0 %328
      %vm330 = vcmp.lt.s32.totalorder %v281, 16
      %v331 = vsel %vm330, %v327, %v329
      %v332 = vsel %vm330, %v329, %v327
      %v334 = vlaneseq
      %v335 = vshrl.u32 %v334, 7
      %v336 = vsub.s32 0, %v335
      %v337 = vrot.slane %v257, %v336
      %v338 = vlaneseq
      %v339 = vshrl.u32 %v338, 7
      %v340 = vsub.s32 1, %v339
      %v341 = vrot.slane %v257, %v340
      %v344 = vmul.f32 %v332, %v337
      %v345 = vmul.f32 %v331, %v341
      %346 = vrot.lane.b32.xlu0 %v320, 112
      %v347 = vpop.permute.xlu0 %346
      %348 = vrot.lane.b32.xlu0 %v321, 112
      %v349 = vpop.permute.xlu0 %348
      %vm350 = vcmp.lt.s32.totalorder %v281, 112
      %v351 = vsel %vm350, %v347, %v349
      %v352 = vsel %vm350, %v349, %v347
      %v354 = vlaneseq
      %v355 = vshrl.u32 %v354, 7
      %v356 = vsub.s32 0, %v355
      %v357 = vrot.slane %v259, %v356
      %v358 = vlaneseq
      %v359 = vshrl.u32 %v358, 7
      %v360 = vsub.s32 1, %v359
      %v361 = vrot.slane %v259, %v360
      %v364 = vmul.f32 %v351, %v357
      %v365 = vmul.f32 %v352, %v361
      %v366 = vmax.f32 %v344, %v364
      %v367 = vmax.f32 %v345, %v365
      %v368 = vmax.f32 %v320, %v366
      %v369 = vmax.f32 %v321, %v367
      %370 = vrot.lane.b32.xlu0 %v324, 16
      %v371 = vpop.permute.xlu0 %370
      %372 = vrot.lane.b32.xlu0 %v325, 16
      %v373 = vpop.permute.xlu0 %372
      %v374 = vsel %vm330, %v371, %v373
      %v375 = vsel %vm330, %v373, %v371
      %v376 = vmul.f32 %v375, %v337
      %v377 = vmul.f32 %v374, %v341
      %378 = vrot.lane.b32.xlu0 %v324, 112
      %v379 = vpop.permute.xlu0 %378
      %380 = vrot.lane.b32.xlu0 %v325, 112
      %v381 = vpop.permute.xlu0 %380
      %v382 = vsel %vm350, %v379, %v381
      %v383 = vsel %vm350, %v381, %v379
      %v384 = vmul.f32 %v382, %v357
      %v385 = vmul.f32 %v383, %v361
      %v386 = vmin.f32 %v376, %v384
      %v387 = vmin.f32 %v377, %v385
      %v388 = vmin.f32 %v324, %v386
      %v389 = vmin.f32 %v325, %v387
      %v390 = vsub.f32 %v368, %v388
      %v391 = vsub.f32 %v369, %v389
      %p392 = scmp.eq.s32.totalorder %s21, 0
      // Predicated region
      $region33: #{mul_scale_bound_loss.2} parent=31 // pred_check
        %p393 = pneg %p392
      $region34: #{mul_scale_bound_loss.2} parent=31 // pred_check_branch
        %395 = sbr.rel (%p393) target = $region36
      $region35: #{mul_scale_bound_loss.2} parent=31 // pred_region
        %396 = vrot.lane.b32.xlu0 %v260, 1
        %v397 = vpop.permute.xlu0 %396
        %398 = vrot.lane.b32.xlu0 %v261, 1
        %v399 = vpop.permute.xlu0 %398
        %v400 = vsel %vm282, %v397, %v399
        %v401 = vsel %vm282, %v399, %v397
        %v402 = vmul.f32 %v401, %v289
        %v403 = vmul.f32 %v400, %v293
        %404 = vrot.lane.b32.xlu0 %v260, 127
        %v405 = vpop.permute.xlu0 %404
        %406 = vrot.lane.b32.xlu0 %v261, 127
        %v407 = vpop.permute.xlu0 %406
        %v408 = vsel %vm302, %v405, %v407
        %v409 = vsel %vm302, %v407, %v405
        %v410 = vmul.f32 %v408, %v309
        %v411 = vmul.f32 %v409, %v313
        %v412 = vmax.f32 %v402, %v410
        %v413 = vmax.f32 %v403, %v411
        %v414 = vmax.f32 %v260, %v412
        %v415 = vmax.f32 %v261, %v413
        %v416 = vmin.f32 %v402, %v410
        %v417 = vmin.f32 %v403, %v411
        %v418 = vmin.f32 %v260, %v416
        %v419 = vmin.f32 %v261, %v417
        %420 = vrot.lane.b32.xlu0 %v414, 16
        %v421 = vpop.permute.xlu0 %420
        %422 = vrot.lane.b32.xlu0 %v415, 16
        %v423 = vpop.permute.xlu0 %422
        %v424 = vsel %vm330, %v421, %v423
        %v425 = vsel %vm330, %v423, %v421
        %v426 = vmul.f32 %v425, %v337
        %v427 = vmul.f32 %v424, %v341
        %428 = vrot.lane.b32.xlu0 %v414, 112
        %v429 = vpop.permute.xlu0 %428
        %430 = vrot.lane.b32.xlu0 %v415, 112
        %v431 = vpop.permute.xlu0 %430
        %v432 = vsel %vm350, %v429, %v431
        %v433 = vsel %vm350, %v431, %v429
        %v434 = vmul.f32 %v432, %v357
        %v435 = vmul.f32 %v433, %v361
        %v436 = vmax.f32 %v426, %v434
        %v437 = vmax.f32 %v427, %v435
        %v438 = vmax.f32 %v414, %v436
        %v439 = vmax.f32 %v415, %v437
        %440 = vrot.lane.b32.xlu0 %v418, 16
        %v441 = vpop.permute.xlu0 %440
        %442 = vrot.lane.b32.xlu0 %v419, 16
        %v443 = vpop.permute.xlu0 %442
        %v444 = vsel %vm330, %v441, %v443
        %v445 = vsel %vm330, %v443, %v441
        %v446 = vmul.f32 %v445, %v337
        %v447 = vmul.f32 %v444, %v341
        %448 = vrot.lane.b32.xlu0 %v418, 112
        %v449 = vpop.permute.xlu0 %448
        %450 = vrot.lane.b32.xlu0 %v419, 112
        %v451 = vpop.permute.xlu0 %450
        %v452 = vsel %vm350, %v449, %v451
        %v453 = vsel %vm350, %v451, %v449
        %v454 = vmul.f32 %v452, %v357
        %v455 = vmul.f32 %v453, %v361
        %v456 = vmin.f32 %v446, %v454
        %v457 = vmin.f32 %v447, %v455
        %v458 = vmin.f32 %v418, %v456
        %v459 = vmin.f32 %v419, %v457
        %v460 = vsub.f32 %v438, %v458
        %v461 = vsub.f32 %v439, %v459
        %462 = vst [vmem:[#allocation2] sm:$0xff] %v460
        %463 = vst [vmem:[#allocation2 + $0x8] sm:$0xff] %v461
        %v464 = vadd.f32 %v260, %v261
        %465 = vadd.xlane.f32.xlu0 %v464
        %v466 = vpop.xlane.xlu0 %465
        %vm467 = vcmask 7168
        %468 = vst.msk [vmem:[#allocation3] sm:$0xff] %vm467, %v466
        %v469 = vadd.f32 %v460, %v461
        %470 = vadd.xlane.f32.xlu0 %v469
        %v471 = vpop.xlane.xlu0 %470
        %472 = vst.msk [vmem:[#allocation4] sm:$0xff] %vm467, %v471
        %473 = vst.msk [vmem:[%s248] sm:$0xff] %vm467, 0.0
        %474 = vst.msk [vmem:[%s252] sm:$0xff] %vm467, 0.0
      $region36: #{mul_scale_bound_loss.2} parent=31 // pred_fallthru
        _
      %v475 = vld [vmem:[#allocation2] sm:$0xff]
      %v476 = vld [vmem:[#allocation2 + $0x8] sm:$0xff]
      %v477 = vmax.f32 %v262, 0.0
      %v478 = vmax.f32 %v263, 0.0
      %v479 = vmul.f32 %v262, %v260
      %v480 = vmul.f32 %v263, %v261
      %v481 = vsub.f32 %v477, %v479
      %v482 = vsub.f32 %v478, %v480
      %v483 = vsub.f32 1.0, %v273
      %v484 = vsub.f32 1.0, %v275
      %v485 = vmax.f32 %v273, %v483
      %v486 = vmax.f32 %v275, %v484
      %v487 = vlog2.pop %v485
      %v488 = vmul.f32 %v487, 0.6931472
      %v489 = vlog2.pop %v486
      %v490 = vmul.f32 %v489, 0.6931472
      %v491 = vsub.f32 %v481, %v488
      %v492 = vsub.f32 %v482, %v490
      %v493 = vmul.f32 %v273, %v260
      %v494 = vmul.f32 %v275, %v261
      %v495 = vadd.f32 %v493, %v494
      %496 = vadd.xlane.f32.xlu0 %v495
      %v497 = vpop.xlane.xlu0 %496
      %v498 = vadd.f32 %v273, %v275
      %499 = vadd.xlane.f32.xlu0 %v498
      %v500 = vpop.xlane.xlu0 %499
      %v501 = vld [vmem:[#allocation3] sm:$0xff]
      %v502 = vadd.f32 %v500, %v501
      %v503 = vadd.f32 %v497, 1.0
      %v504 = vsub.f32 %v502, %v497
      %v505 = vadd.f32 %v504, 1.0
      %v506 = vrcp.pop %v505
      %v507 = vmul.f32 %v503, %v506
      %vm508 = vcmp.gt.f32.partialorder %v475, 0.5
      %vm509 = vcmp.gt.f32.partialorder %v476, 0.5
      %v510 = vsub.f32 1.0, %v390
      %v511 = vsub.f32 1.0, %v391
      %v512 = vsel %vm508, %v390, %v510
      %v513 = vsel %vm509, %v391, %v511
      %v514 = vlog2.pop %v512
      %v515 = vmul.f32 %v514, 0.6931472
      %v516 = vlog2.pop %v513
      %v517 = vmul.f32 %v516, 0.6931472
      %v518 = vmax.f32 %v515, -100.0
      %v519 = vmax.f32 %v517, -100.0
      %v520 = vsub.f32 0.0, %v518
      %v521 = vsub.f32 0.0, %v519
      %v522 = vmul.f32 %v390, %v475
      %v523 = vmul.f32 %v391, %v476
      %v524 = vadd.f32 %v522, %v523
      %525 = vadd.xlane.f32.xlu0 %v524
      %v526 = vpop.xlane.xlu0 %525
      %v527 = vadd.f32 %v390, %v391
      %528 = vadd.xlane.f32.xlu0 %v527
      %v529 = vpop.xlane.xlu0 %528
      %v530 = vld [vmem:[#allocation4] sm:$0xff]
      %v531 = vadd.f32 %v529, %v530
      %v532 = vadd.f32 %v526, 1.0
      %v533 = vsub.f32 %v531, %v526
      %v534 = vadd.f32 %v533, 1.0
      %v535 = vrcp.pop %v534
      %v536 = vmul.f32 %v532, %v535
      %v537 = vld [vmem:[%s248] sm:$0xff]
      %v538 = vsub.f32 2.0, %v507
      %v539 = vsub.f32 %v538, %v536
      %v540 = vadd.f32 %v537, %v539
      %vm541 = vcmask 7168
      %542 = vst.msk [vmem:[%s248] sm:$0xff] %vm541, %v540
      %v543 = vld [vmem:[%s252] sm:$0xff]
      %v544 = vadd.f32 %v491, %v520
      %v545 = vadd.f32 %v492, %v521
      %v546 = vadd.f32 %v544, %v545
      %547 = vadd.xlane.f32.xlu0 %v546
      %v548 = vpop.xlane.xlu0 %547
      %v549 = vadd.f32 %v543, %v548
      %550 = vst.msk [vmem:[%s252] sm:$0xff] %vm541, %v549
      %p551 = scmp.lt.s32.totalorder %s20, 0
      %s552 = scalar_select %p551, %s20, 0
      %s553 = smul.addr %s552, 8
      %s554 = scalar_lea.vmem %s3, %s553
      %p555 = scmp.lt.s32.totalorder %s20, 0
      %s556 = scalar_select %p555, %s20, 0
      %s557 = smul.addr %s556, 8
      %s558 = scalar_lea.vmem %s4, %s557
      // Predicated region
      $region37: #{mul_scale_bound_loss.2} parent=31 // pred_check
        %p559 = pneg %p121
      $region38: #{mul_scale_bound_loss.2} parent=31 // pred_check_branch
        %561 = sbr.rel (%p559) target = $region40
      $region39: #{mul_scale_bound_loss.2} parent=31 // pred_region
        _
      $region40: #{mul_scale_bound_loss.2} parent=31 // pred_fallthru
        _
      // Predicated region
      $region41: #{mul_scale_bound_loss.2} parent=31 // pred_check
        %p562 = pneg %p147
      $region42: #{mul_scale_bound_loss.2} parent=31 // pred_check_branch
        %564 = sbr.rel (%p562) target = $region44
      $region43: #{mul_scale_bound_loss.2} parent=31 // pred_region
        _
      $region44: #{mul_scale_bound_loss.2} parent=31 // pred_fallthru
        _
      // Predicated region
      $region45: #{mul_scale_bound_loss.2} parent=31 // pred_check
        %p565 = pneg %p121
      $region46: #{mul_scale_bound_loss.2} parent=31 // pred_check_branch
        %567 = sbr.rel (%p565) target = $region48
      $region47: #{mul_scale_bound_loss.2} parent=31 // pred_region
        %p568 = scmp.lt.s32.totalorder %s20, 0
        %s569 = scalar_select %p568, %s20, 0
        %s570 = smul.addr %s569, 8
        %s571 = scalar_lea.vmem %s3, %s570
      $region48: #{mul_scale_bound_loss.2} parent=31 // pred_fallthru
        _
      // Predicated region
      $region49: #{mul_scale_bound_loss.2} parent=31 // pred_check
        %p572 = pneg %p147
      $region50: #{mul_scale_bound_loss.2} parent=31 // pred_check_branch
        %574 = sbr.rel (%p572) target = $region52
      $region51: #{mul_scale_bound_loss.2} parent=31 // pred_region
        %p575 = scmp.lt.s32.totalorder %s20, 0
        %s576 = scalar_select %p575, %s20, 0
        %s577 = smul.addr %s576, 8
        %s578 = scalar_lea.vmem %s4, %s577
      $region52: #{mul_scale_bound_loss.2} parent=31 // pred_fallthru
        _
    $region32: #{mul_scale_bound_loss.2} parent=5 // pred_fallthru
      _
    %p579 = scmp.le.s32.totalorder 2, %s11
    // Predicated region
    $region53: #{mul_scale_bound_loss.2} parent=5 // pred_check
      %p580 = pneg %p579
    $region54: #{mul_scale_bound_loss.2} parent=5 // pred_check_branch
      %582 = sbr.rel (%p580) target = $region56
    $region55: #{mul_scale_bound_loss.2} parent=5 // pred_region
      %s583 = ssub.s32 %s11, 2
    $region56: #{mul_scale_bound_loss.2} parent=5 // pred_fallthru
      _
  $region6: #{mul_scale_bound_loss.2} parent=0 // loop_footer
    %s15 = sadd.s32 1, %s11
  $region7: #{mul_scale_bound_loss.2} parent=0 // loop_footer_branch
    %10 = sbr.rel target = $region3
  $region8: #{mul_scale_bound_loss.2} parent=0 // loop_exit
    _

</llo_original>
